<compile_context>
chip_gen: v5e
topology: v5e:2x2
jax: 0.10.0
libtpu: 0.0.40
codegen_flags: <defaults>
</compile_context>

<pallas_src>
import jax
import jax.numpy as jnp
from jax.experimental import pallas as pl
from jax.experimental.pallas import tpu as pltpu

BN_EPS = 1e-5


# --------------------------------------------------------------------------- #
# Kernel
# --------------------------------------------------------------------------- #
def _fused_cnn_kernel(x_ref, bw1_ref, s1_ref, b1_ref, er1_ref, ec1_ref,
                      bw2_ref, s2_ref, b2_ref, er2_ref, ec2_ref,
                      o_ref, xp1, xp2):
    """One batch block: [conv3x3 + BN + ReLU + maxpool2x2] x 2, fully fused.

    Activation layout everywhere: rows = (image, h), lanes = w*C + c.

    x_ref  : (B, H, W*Cin)            lane-folded input block
    bw1_ref: (3, W*Cin, W*C1)         block-banded conv1 weights (one per kh)
    s1/b1  : (1, W*C1)                folded BN scale/bias tiled over lanes
    er1_ref: (2, B*H/2, B*H)          even/odd row selection (vertical pool 1)
    ec1_ref: (2, W*C1, (W/2)*C1)      even/odd lane selection (horizontal pool 1)
    bw2_ref: (3, (W/2)*C1, (W/2)*C2)  block-banded conv2 weights
    s2/b2  : (1, (W/2)*C2)
    er2_ref: (2, B*H/4, B*H/2)
    ec2_ref: (2, (W/2)*C2, (W/4)*C2)
    o_ref  : (1, B*H/4, (W/4)*C2)     lane-dense output slab
    xp1    : VMEM (B, H+2, W*Cin)     H-padded layer-1 rows (halo rows zeroed)
    xp2    : VMEM (B, H/2+2, (W/2)*C1)
    """
    B, H, K1 = x_ref.shape
    H2 = er1_ref.shape[1] // B
    L1p = ec1_ref.shape[2]

    def conv_bn_relu(xp, bw_ref, s_ref, b_ref, rows):
        # 3x3 conv as three matmuls (one per kh).  kw taps + W zero padding are
        # folded into the banded weight, so the only in-kernel data movement is
        # a sublane-offset slab slice.  Accumulation stays f32 on the MXU.
        k = xp.shape[2]
        acc = None
        for kh in range(3):
            slab = xp[:, kh:kh + rows, :].reshape(B * rows, k)
            slab = slab.astype(bw_ref.dtype)        # bf16 MXU path if requested
            term = jnp.dot(slab, bw_ref[kh],
                           preferred_element_type=jnp.float32)
            acc = term if acc is None else acc + term
        # folded BatchNorm (+ conv bias) and ReLU: dense per-lane FMA in f32
        return jnp.maximum(acc * s_ref[...] + b_ref[...], 0.0)

    def maxpool2x2(y, er_ref, ec_ref):
        # vertical pool: select even/odd rows with exact 0/1 matrices, then max
        t = jnp.maximum(
            jnp.dot(er_ref[0], y, preferred_element_type=jnp.float32),
            jnp.dot(er_ref[1], y, preferred_element_type=jnp.float32))
        # horizontal pool: select even/odd w lane-blocks; result lands directly
        # in the lane-folded layout of the next stage (no relayout / reshape)
        return jnp.maximum(
            jnp.dot(t, ec_ref[0], preferred_element_type=jnp.float32),
            jnp.dot(t, ec_ref[1], preferred_element_type=jnp.float32))

    # ---- layer 1: zero only the 2-row H halo (megacore-safe), write interior
    zrow1 = jnp.zeros((B, 1, K1), jnp.float32)
    xp1[:, 0:1, :] = zrow1
    xp1[:, H + 1:H + 2, :] = zrow1
    xp1[:, 1:H + 1, :] = x_ref[...]
    y1 = conv_bn_relu(xp1, bw1_ref, s1_ref, b1_ref, H)      # (B*H, W*C1)
    p1 = maxpool2x2(y1, er1_ref, ec1_ref)                   # (B*H2, W2*C1)
    # Dropout (eval) = identity

    # ---- layer 2: intermediate stays in VMEM (no HBM round trip)
    zrow2 = jnp.zeros((B, 1, L1p), jnp.float32)
    xp2[:, 0:1, :] = zrow2
    xp2[:, H2 + 1:H2 + 2, :] = zrow2
    xp2[:, 1:H2 + 1, :] = p1.reshape(B, H2, L1p)
    y2 = conv_bn_relu(xp2, bw2_ref, s2_ref, b2_ref, H2)     # (B*H2, W2*C2)
    p2 = maxpool2x2(y2, er2_ref, ec2_ref)                   # (B*H4, W4*C2)
    # Dropout (eval) = identity

    # lane-dense store (last dim is a multiple of 128 when W % 16 == 0)
    o_ref[0] = p2.astype(o_ref.dtype)


# --------------------------------------------------------------------------- #
# Wrapper-side parameter preparation (layout plumbing, no heavy compute)
# --------------------------------------------------------------------------- #
def fold_bn(conv_bias, gamma, beta, mean, var):
    scale = gamma / jnp.sqrt(var + BN_EPS)
    bias = (conv_bias - mean) * scale + beta
    return scale, bias


def _banded_conv_weights(w_hwio, width, dtype):
    """(3,3,Cin,Cout) conv weights -> (3, width*Cin, width*Cout) block-banded.

    big[kh, w_in*Cin+ci, w_out*Cout+co] = w_hwio[kh, w_in-w_out+1, ci, co]
    (zero outside the 3-wide band), so `row_slab @ big[kh]` applies the kw taps
    AND the W-direction "same" zero padding in one MXU pass.
    """
    _, _, cin, cout = w_hwio.shape
    w_in = jnp.arange(width)[:, None]
    w_out = jnp.arange(width)[None, :]
    kw = w_in - w_out + 1                                   # (W, W)
    valid = ((kw >= 0) & (kw <= 2)).astype(w_hwio.dtype)
    blocks = w_hwio[:, jnp.clip(kw, 0, 2)]                  # (3, W, W, Cin, Cout)
    blocks = blocks * valid[None, :, :, None, None]
    big = blocks.transpose(0, 1, 3, 2, 4).reshape(3, width * cin, width * cout)
    return big.astype(dtype)


def _row_select(nimg, rows, parity):
    """(nimg*rows/2, nimg*rows) 0/1 matrix picking row 2r+parity of each image."""
    half = rows // 2
    out_idx = jnp.arange(nimg * half)
    b, r = out_idx // half, out_idx % half
    in_idx = b * rows + 2 * r + parity
    m = jnp.zeros((nimg * half, nimg * rows), jnp.float32)
    return m.at[out_idx, in_idx].set(1.0)


def _col_select(width, ch, parity):
    """(width*ch, (width/2)*ch) 0/1 matrix picking lane (2j+parity)*ch + c."""
    half = width // 2
    out_idx = jnp.arange(half * ch)
    j, c = out_idx // ch, out_idx % ch
    in_idx = (2 * j + parity) * ch + c
    m = jnp.zeros((width * ch, half * ch), jnp.float32)
    return m.at[in_idx, out_idx].set(1.0)


def _pick_batch_block(n, cap=8):
    """Largest divisor of n <= cap that keeps >= 2 grid steps (v7x megacore)."""
    if n <= 1:
        return 1
    target = max(1, min(cap, n // 2))
    for b in range(target, 0, -1):
        if n % b == 0:
            return b
    return 1


# --------------------------------------------------------------------------- #
# Public forward
# --------------------------------------------------------------------------- #
def cnn_layers_forward(x_nchw, params, *, batch_block=None,
                       matmul_dtype=jnp.float32):
    """Pallas implementation of CNNLayers.forward (eval mode)."""
    N, Cin, H, W = x_nchw.shape
    # PyTorch MaxPool2d(2) floors odd sizes; this kernel requires two exact halvings.
    assert H % 4 == 0 and W % 4 == 0, "H and W must be multiples of 4"

    C1 = params["w1"].shape[3]
    C2 = params["w2"].shape[3]
    H2, W2, H4, W4 = H // 2, W // 2, H // 4, W // 4

    B = batch_block if batch_block is not None else _pick_batch_block(N)
    assert N % B == 0, "batch_block must divide N"
    steps = N // B

    # NCHW -> lane-folded (N, H, W*Cin)  (wrapper-side layout plumbing only)
    x = jnp.transpose(x_nchw, (0, 2, 3, 1)).reshape(N, H, W * Cin)

    # block-banded conv weights (kw taps + W zero padding folded in)
    bw1 = _banded_conv_weights(params["w1"], W, matmul_dtype)     # (3, W*Cin, W*C1)
    bw2 = _banded_conv_weights(params["w2"], W2, matmul_dtype)    # (3, W2*C1, W2*C2)

    # BatchNorm (+ conv bias) folded, then tiled over the (w, c) lane axis
    s1, b1 = fold_bn(params["b1"], params["g1"], params["beta1"],
                     params["m1"], params["v1"])
    s2, b2 = fold_bn(params["b2"], params["g2"], params["beta2"],
                     params["m2"], params["v2"])
    s1l, b1l = jnp.tile(s1, W)[None, :], jnp.tile(b1, W)[None, :]    # (1, W*C1)
    s2l, b2l = jnp.tile(s2, W2)[None, :], jnp.tile(b2, W2)[None, :]  # (1, W2*C2)

    # exact 0/1 selection matrices used by the maxpools (kept f32 for exactness)
    er1 = jnp.stack([_row_select(B, H, p) for p in (0, 1)])    # (2, B*H2, B*H)
    ec1 = jnp.stack([_col_select(W, C1, p) for p in (0, 1)])   # (2, W*C1, W2*C1)
    er2 = jnp.stack([_row_select(B, H2, p) for p in (0, 1)])   # (2, B*H4, B*H2)
    ec2 = jnp.stack([_col_select(W2, C2, p) for p in (0, 1)])  # (2, W2*C2, W4*C2)

    out = pl.pallas_call(
        _fused_cnn_kernel,
        out_shape=jax.ShapeDtypeStruct((steps, B * H4, W4 * C2), jnp.float32),
        grid_spec=pltpu.PrefetchScalarGridSpec(
            num_scalar_prefetch=0,
            grid=(steps,),
            in_specs=[
                pl.BlockSpec((B, H, W * Cin), lambda n: (n, 0, 0)),
                # constant index maps: weights / scale / bias / selection
                # matrices are re-used across all grid steps
                pl.BlockSpec((3, W * Cin, W * C1), lambda n: (0, 0, 0)),
                pl.BlockSpec((1, W * C1), lambda n: (0, 0)),
                pl.BlockSpec((1, W * C1), lambda n: (0, 0)),
                pl.BlockSpec((2, B * H2, B * H), lambda n: (0, 0, 0)),
                pl.BlockSpec((2, W * C1, W2 * C1), lambda n: (0, 0, 0)),
                pl.BlockSpec((3, W2 * C1, W2 * C2), lambda n: (0, 0, 0)),
                pl.BlockSpec((1, W2 * C2), lambda n: (0, 0)),
                pl.BlockSpec((1, W2 * C2), lambda n: (0, 0)),
                pl.BlockSpec((2, B * H4, B * H2), lambda n: (0, 0, 0)),
                pl.BlockSpec((2, W2 * C2, W4 * C2), lambda n: (0, 0, 0)),
            ],
            out_specs=pl.BlockSpec((1, B * H4, W4 * C2), lambda n: (n, 0, 0)),
            scratch_shapes=[
                pltpu.VMEM((B, H + 2, W * Cin), jnp.float32),
                pltpu.VMEM((B, H2 + 2, W2 * C1), jnp.float32),
            ],
        ),
        compiler_params=pltpu.CompilerParams(
            dimension_semantics=("parallel",),
            vmem_limit_bytes=32 * 1024 * 1024,
        ),
    )(x, bw1, s1l, b1l, er1, ec1, bw2, s2l, b2l, er2, ec2)

    # (steps, B*H4, W4*C2) -> NHWC -> torch NCHW flatten order (layout plumbing)
    y = out.reshape(N, H4, W4, C2).transpose(0, 3, 1, 2)
    return y.reshape(N, -1)


# --------------------------------------------------------------------------- #
# Pure-JAX reference + demo
# --------------------------------------------------------------------------- #
def reference_forward(x_nchw, params):
    """Pure-JAX reference matching PyTorch semantics (eval mode)."""
    def block(x, w_hwio, cb, g, beta, mean, var):
        w_oihw = jnp.transpose(w_hwio, (3, 2, 0, 1))
        y = jax.lax.conv_general_dilated(
            x, w_oihw, window_strides=(1, 1), padding=((1, 1), (1, 1)),
            dimension_numbers=("NCHW", "OIHW", "NCHW"))
        y = y + cb[None, :, None, None]
        y = (y - mean[None, :, None, None]) / jnp.sqrt(
            var[None, :, None, None] + BN_EPS)
        y = y * g[None, :, None, None] + beta[None, :, None, None]
        y = jnp.maximum(y, 0.0)
        N, C, H, W = y.shape
        return y.reshape(N, C, H // 2, 2, W // 2, 2).max(axis=(3, 5))

    y = block(x_nchw, params["w1"], params["b1"], params["g1"],
              params["beta1"], params["m1"], params["v1"])
    y = block(y, params["w2"], params["b2"], params["g2"],
              params["beta2"], params["m2"], params["v2"])
    return y.reshape(y.shape[0], -1)


def init_params(key, cin):
    ks = jax.random.split(key, 8)
    return {
        # conv weights in HWIO
        "w1": 0.1 * jax.random.normal(ks[0], (3, 3, cin, 8), jnp.float32),
        "b1": 0.1 * jax.random.normal(ks[1], (8,), jnp.float32),
        "w2": 0.1 * jax.random.normal(ks[2], (3, 3, 8, 32), jnp.float32),
        "b2": 0.1 * jax.random.normal(ks[3], (32,), jnp.float32),
        # BatchNorm params / running stats (eval mode)
        "g1": 1.0 + 0.1 * jax.random.normal(ks[4], (8,), jnp.float32),
        "beta1": 0.1 * jax.random.normal(ks[5], (8,), jnp.float32),
        "m1": 0.05 * jax.random.normal(ks[6], (8,), jnp.float32),
        "v1": 0.5 + jax.random.uniform(ks[7], (8,), jnp.float32),
        "g2": jnp.ones((32,), jnp.float32),
        "beta2": jnp.zeros((32,), jnp.float32),
        "m2": jnp.zeros((32,), jnp.float32),
        "v2": jnp.ones((32,), jnp.float32),
    }


if __name__ == "__main__":
    key = jax.random.PRNGKey(0)
    k_x, k_p = jax.random.split(key)

    N, CIN, H, W = 2, 4, 16, 16
    x = jax.random.normal(k_x, (N, CIN, H, W), jnp.float32)
    params = init_params(k_p, CIN)

    # f32 path: exact parity with the reference
    fwd = jax.jit(cnn_layers_forward)
    out = jax.block_until_ready(fwd(x, params))
    ref = reference_forward(x, params)
    assert out.shape == (N, 32 * (H // 4) * (W // 4)), out.shape
    assert jnp.allclose(out, ref, atol=1e-4, rtol=1e-4), (
        float(jnp.max(jnp.abs(out - ref))))

    # bf16 MXU-operand path (recommended for v6e/v7x): f32 accumulation,
    # loose sanity check only (bf16 operand rounding).
    fwd_bf16 = jax.jit(
        lambda xx, pp: cnn_layers_forward(xx, pp, matmul_dtype=jnp.bfloat16))
    out_bf16 = jax.block_until_ready(fwd_bf16(x, params))
    assert bool(jnp.all(jnp.isfinite(out_bf16)))
    assert jnp.allclose(out_bf16, ref, atol=0.3, rtol=0.1), (
        float(jnp.max(jnp.abs(out_bf16 - ref))))

    print("KERNEL_OK")
</pallas_src>

<mosaic_0001>
module attributes {stable_mosaic.version = 11 : i64} {
  func.func @_fused_cnn_kernel(%arg0: i32, %arg1: memref<1x16x64xf32, #tpu.memory_space<vmem>>, %arg2: memref<3x64x128xf32, #tpu.memory_space<vmem>>, %arg3: memref<1x128xf32, #tpu.memory_space<vmem>>, %arg4: memref<1x128xf32, #tpu.memory_space<vmem>>, %arg5: memref<2x8x16xf32, #tpu.memory_space<vmem>>, %arg6: memref<2x128x64xf32, #tpu.memory_space<vmem>>, %arg7: memref<3x64x256xf32, #tpu.memory_space<vmem>>, %arg8: memref<1x256xf32, #tpu.memory_space<vmem>>, %arg9: memref<1x256xf32, #tpu.memory_space<vmem>>, %arg10: memref<2x4x8xf32, #tpu.memory_space<vmem>>, %arg11: memref<2x256x128xf32, #tpu.memory_space<vmem>>, %arg12: memref<1x4x128xf32, #tpu.memory_space<vmem>>, %arg13: memref<1x18x64xf32, #tpu.memory_space<vmem>>, %arg14: memref<1x10x64xf32, #tpu.memory_space<vmem>>) attributes {dimension_semantics = [#tpu.dimension_semantics<parallel>], iteration_bounds = array<i64: 2>, scalar_prefetch = 0 : i64, scratch_operands = 2 : i64, tpu.core_type = #tpu.core_type<tc>, window_params = [{transform_indices = @transform_0, window_bounds = array<i64: 1, 16, 64>}, {pipeline_mode = #tpu.pipeline_mode<synchronous>, transform_indices = @transform_1, window_bounds = array<i64: 3, 64, 128>}, {pipeline_mode = #tpu.pipeline_mode<synchronous>, transform_indices = @transform_2, window_bounds = array<i64: 1, 128>}, {pipeline_mode = #tpu.pipeline_mode<synchronous>, transform_indices = @transform_3, window_bounds = array<i64: 1, 128>}, {pipeline_mode = #tpu.pipeline_mode<synchronous>, transform_indices = @transform_4, window_bounds = array<i64: 2, 8, 16>}, {pipeline_mode = #tpu.pipeline_mode<synchronous>, transform_indices = @transform_5, window_bounds = array<i64: 2, 128, 64>}, {pipeline_mode = #tpu.pipeline_mode<synchronous>, transform_indices = @transform_6, window_bounds = array<i64: 3, 64, 256>}, {pipeline_mode = #tpu.pipeline_mode<synchronous>, transform_indices = @transform_7, window_bounds = array<i64: 1, 256>}, {pipeline_mode = #tpu.pipeline_mode<synchronous>, transform_indices = @transform_8, window_bounds = array<i64: 1, 256>}, {pipeline_mode = #tpu.pipeline_mode<synchronous>, transform_indices = @transform_9, window_bounds = array<i64: 2, 4, 8>}, {pipeline_mode = #tpu.pipeline_mode<synchronous>, transform_indices = @transform_10, window_bounds = array<i64: 2, 256, 128>}, {transform_indices = @transform_11, window_bounds = array<i64: 1, 4, 128>}]} {
    %cst = arith.constant 0.000000e+00 : f32
    %0 = vector.broadcast %cst : f32 to vector<1x1x64xf32>
    %c0 = arith.constant 0 : index
    %c0_0 = arith.constant 0 : index
    %c0_1 = arith.constant 0 : index
    %1 = vector.load %arg13[%c0, %c0_0, %c0_1] : memref<1x18x64xf32, #tpu.memory_space<vmem>>, vector<1x1x64xf32>
    tpu.vector_store %arg13[%c0, %c0_0, %c0_1], %0 {strides = array<i32>} : memref<1x18x64xf32, #tpu.memory_space<vmem>>, vector<1x1x64xf32>,
    %c0_2 = arith.constant 0 : index
    %c17 = arith.constant 17 : index
    %c0_3 = arith.constant 0 : index
    %2 = vector.load %arg13[%c0_2, %c17, %c0_3] : memref<1x18x64xf32, #tpu.memory_space<vmem>>, vector<1x1x64xf32>
    tpu.vector_store %arg13[%c0_2, %c17, %c0_3], %0 {strides = array<i32>} : memref<1x18x64xf32, #tpu.memory_space<vmem>>, vector<1x1x64xf32>,
    %c0_4 = arith.constant 0 : index
    %c0_5 = arith.constant 0 : index
    %c0_6 = arith.constant 0 : index
    %3 = vector.load %arg1[%c0_4, %c0_5, %c0_6] : memref<1x16x64xf32, #tpu.memory_space<vmem>>, vector<1x16x64xf32>
    %c0_7 = arith.constant 0 : index
    %c1 = arith.constant 1 : index
    %c0_8 = arith.constant 0 : index
    %4 = vector.load %arg13[%c0_7, %c1, %c0_8] : memref<1x18x64xf32, #tpu.memory_space<vmem>>, vector<1x16x64xf32>
    tpu.vector_store %arg13[%c0_7, %c1, %c0_8], %3 {strides = array<i32>} : memref<1x18x64xf32, #tpu.memory_space<vmem>>, vector<1x16x64xf32>,
    %c0_9 = arith.constant 0 : index
    %c0_10 = arith.constant 0 : index
    %c0_11 = arith.constant 0 : index
    %5 = vector.load %arg13[%c0_9, %c0_10, %c0_11] : memref<1x18x64xf32, #tpu.memory_space<vmem>>, vector<1x16x64xf32>
    %6 = vector.shape_cast %5 : vector<1x16x64xf32> to vector<16x64xf32>
    %c0_12 = arith.constant 0 : index
    %c0_13 = arith.constant 0 : index
    %c0_14 = arith.constant 0 : index
    %7 = vector.load %arg2[%c0_12, %c0_13, %c0_14] : memref<3x64x128xf32, #tpu.memory_space<vmem>>, vector<1x64x128xf32>
    %8 = vector.shape_cast %7 : vector<1x64x128xf32> to vector<64x128xf32>
    %cst_15 = arith.constant dense<0.000000e+00> : vector<16x128xf32>
    %9 = tpu.matmul %6, %8, %cst_15 {dimension_numbers = #tpu.dot_dimension_numbers<[1], [0], [0], [1], [0, 0, 1, 1], [], []>} : vector<16x64xf32>, vector<64x128xf32>, vector<16x128xf32> -> vector<16x128xf32>
    %c0_16 = arith.constant 0 : index
    %c1_17 = arith.constant 1 : index
    %c0_18 = arith.constant 0 : index
    %10 = vector.load %arg13[%c0_16, %c1_17, %c0_18] : memref<1x18x64xf32, #tpu.memory_space<vmem>>, vector<1x16x64xf32>
    %11 = vector.shape_cast %10 : vector<1x16x64xf32> to vector<16x64xf32>
    %c1_19 = arith.constant 1 : index
    %c0_20 = arith.constant 0 : index
    %c0_21 = arith.constant 0 : index
    %12 = vector.load %arg2[%c1_19, %c0_20, %c0_21] : memref<3x64x128xf32, #tpu.memory_space<vmem>>, vector<1x64x128xf32>
    %13 = vector.shape_cast %12 : vector<1x64x128xf32> to vector<64x128xf32>
    %cst_22 = arith.constant dense<0.000000e+00> : vector<16x128xf32>
    %14 = tpu.matmul %11, %13, %cst_22 {dimension_numbers = #tpu.dot_dimension_numbers<[1], [0], [0], [1], [0, 0, 1, 1], [], []>} : vector<16x64xf32>, vector<64x128xf32>, vector<16x128xf32> -> vector<16x128xf32>
    %15 = arith.addf %9, %14 : vector<16x128xf32>
    %c0_23 = arith.constant 0 : index
    %c2 = arith.constant 2 : index
    %c0_24 = arith.constant 0 : index
    %16 = vector.load %arg13[%c0_23, %c2, %c0_24] : memref<1x18x64xf32, #tpu.memory_space<vmem>>, vector<1x16x64xf32>
    %17 = vector.shape_cast %16 : vector<1x16x64xf32> to vector<16x64xf32>
    %c2_25 = arith.constant 2 : index
    %c0_26 = arith.constant 0 : index
    %c0_27 = arith.constant 0 : index
    %18 = vector.load %arg2[%c2_25, %c0_26, %c0_27] : memref<3x64x128xf32, #tpu.memory_space<vmem>>, vector<1x64x128xf32>
    %19 = vector.shape_cast %18 : vector<1x64x128xf32> to vector<64x128xf32>
    %cst_28 = arith.constant dense<0.000000e+00> : vector<16x128xf32>
    %20 = tpu.matmul %17, %19, %cst_28 {dimension_numbers = #tpu.dot_dimension_numbers<[1], [0], [0], [1], [0, 0, 1, 1], [], []>} : vector<16x64xf32>, vector<64x128xf32>, vector<16x128xf32> -> vector<16x128xf32>
    %21 = arith.addf %15, %20 : vector<16x128xf32>
    %c0_29 = arith.constant 0 : index
    %c0_30 = arith.constant 0 : index
    %22 = vector.load %arg3[%c0_29, %c0_30] : memref<1x128xf32, #tpu.memory_space<vmem>>, vector<1x128xf32>
    %23 = vector.broadcast %22 : vector<1x128xf32> to vector<16x128xf32>
    %24 = arith.mulf %21, %23 : vector<16x128xf32>
    %c0_31 = arith.constant 0 : index
    %c0_32 = arith.constant 0 : index
    %25 = vector.load %arg4[%c0_31, %c0_32] : memref<1x128xf32, #tpu.memory_space<vmem>>, vector<1x128xf32>
    %26 = vector.broadcast %25 : vector<1x128xf32> to vector<16x128xf32>
    %27 = arith.addf %24, %26 : vector<16x128xf32>
    %cst_33 = arith.constant 0.000000e+00 : f32
    %28 = vector.broadcast %cst_33 : f32 to vector<16x128xf32>
    %29 = arith.maximumf %27, %28 : vector<16x128xf32>
    %c0_34 = arith.constant 0 : index
    %c0_35 = arith.constant 0 : index
    %c0_36 = arith.constant 0 : index
    %30 = vector.load %arg5[%c0_34, %c0_35, %c0_36] : memref<2x8x16xf32, #tpu.memory_space<vmem>>, vector<1x8x16xf32>
    %31 = vector.shape_cast %30 : vector<1x8x16xf32> to vector<8x16xf32>
    %cst_37 = arith.constant dense<0.000000e+00> : vector<8x128xf32>
    %32 = tpu.matmul %31, %29, %cst_37 {dimension_numbers = #tpu.dot_dimension_numbers<[1], [0], [0], [1], [0, 0, 1, 1], [], []>} : vector<8x16xf32>, vector<16x128xf32>, vector<8x128xf32> -> vector<8x128xf32>
    %c1_38 = arith.constant 1 : index
    %c0_39 = arith.constant 0 : index
    %c0_40 = arith.constant 0 : index
    %33 = vector.load %arg5[%c1_38, %c0_39, %c0_40] : memref<2x8x16xf32, #tpu.memory_space<vmem>>, vector<1x8x16xf32>
    %34 = vector.shape_cast %33 : vector<1x8x16xf32> to vector<8x16xf32>
    %cst_41 = arith.constant dense<0.000000e+00> : vector<8x128xf32>
    %35 = tpu.matmul %34, %29, %cst_41 {dimension_numbers = #tpu.dot_dimension_numbers<[1], [0], [0], [1], [0, 0, 1, 1], [], []>} : vector<8x16xf32>, vector<16x128xf32>, vector<8x128xf32> -> vector<8x128xf32>
    %36 = arith.maximumf %32, %35 : vector<8x128xf32>
    %c0_42 = arith.constant 0 : index
    %c0_43 = arith.constant 0 : index
    %c0_44 = arith.constant 0 : index
    %37 = vector.load %arg6[%c0_42, %c0_43, %c0_44] : memref<2x128x64xf32, #tpu.memory_space<vmem>>, vector<1x128x64xf32>
    %38 = vector.shape_cast %37 : vector<1x128x64xf32> to vector<128x64xf32>
    %cst_45 = arith.constant dense<0.000000e+00> : vector<8x64xf32>
    %39 = tpu.matmul %36, %38, %cst_45 {dimension_numbers = #tpu.dot_dimension_numbers<[1], [0], [0], [1], [0, 0, 1, 1], [], []>} : vector<8x128xf32>, vector<128x64xf32>, vector<8x64xf32> -> vector<8x64xf32>
    %c1_46 = arith.constant 1 : index
    %c0_47 = arith.constant 0 : index
    %c0_48 = arith.constant 0 : index
    %40 = vector.load %arg6[%c1_46, %c0_47, %c0_48] : memref<2x128x64xf32, #tpu.memory_space<vmem>>, vector<1x128x64xf32>
    %41 = vector.shape_cast %40 : vector<1x128x64xf32> to vector<128x64xf32>
    %cst_49 = arith.constant dense<0.000000e+00> : vector<8x64xf32>
    %42 = tpu.matmul %36, %41, %cst_49 {dimension_numbers = #tpu.dot_dimension_numbers<[1], [0], [0], [1], [0, 0, 1, 1], [], []>} : vector<8x128xf32>, vector<128x64xf32>, vector<8x64xf32> -> vector<8x64xf32>
    %43 = arith.maximumf %39, %42 : vector<8x64xf32>
    %cst_50 = arith.constant 0.000000e+00 : f32
    %44 = vector.broadcast %cst_50 : f32 to vector<1x1x64xf32>
    %c0_51 = arith.constant 0 : index
    %c0_52 = arith.constant 0 : index
    %c0_53 = arith.constant 0 : index
    %45 = vector.load %arg14[%c0_51, %c0_52, %c0_53] : memref<1x10x64xf32, #tpu.memory_space<vmem>>, vector<1x1x64xf32>
    tpu.vector_store %arg14[%c0_51, %c0_52, %c0_53], %44 {strides = array<i32>} : memref<1x10x64xf32, #tpu.memory_space<vmem>>, vector<1x1x64xf32>,
    %c0_54 = arith.constant 0 : index
    %c9 = arith.constant 9 : index
    %c0_55 = arith.constant 0 : index
    %46 = vector.load %arg14[%c0_54, %c9, %c0_55] : memref<1x10x64xf32, #tpu.memory_space<vmem>>, vector<1x1x64xf32>
    tpu.vector_store %arg14[%c0_54, %c9, %c0_55], %44 {strides = array<i32>} : memref<1x10x64xf32, #tpu.memory_space<vmem>>, vector<1x1x64xf32>,
    %47 = vector.shape_cast %43 : vector<8x64xf32> to vector<1x8x64xf32>
    %c0_56 = arith.constant 0 : index
    %c1_57 = arith.constant 1 : index
    %c0_58 = arith.constant 0 : index
    %48 = vector.load %arg14[%c0_56, %c1_57, %c0_58] : memref<1x10x64xf32, #tpu.memory_space<vmem>>, vector<1x8x64xf32>
    tpu.vector_store %arg14[%c0_56, %c1_57, %c0_58], %47 {strides = array<i32>} : memref<1x10x64xf32, #tpu.memory_space<vmem>>, vector<1x8x64xf32>,
    %c0_59 = arith.constant 0 : index
    %c0_60 = arith.constant 0 : index
    %c0_61 = arith.constant 0 : index
    %49 = vector.load %arg14[%c0_59, %c0_60, %c0_61] : memref<1x10x64xf32, #tpu.memory_space<vmem>>, vector<1x8x64xf32>
    %50 = vector.shape_cast %49 : vector<1x8x64xf32> to vector<8x64xf32>
    %c0_62 = arith.constant 0 : index
    %c0_63 = arith.constant 0 : index
    %c0_64 = arith.constant 0 : index
    %51 = vector.load %arg7[%c0_62, %c0_63, %c0_64] : memref<3x64x256xf32, #tpu.memory_space<vmem>>, vector<1x64x256xf32>
    %52 = vector.shape_cast %51 : vector<1x64x256xf32> to vector<64x256xf32>
    %cst_65 = arith.constant dense<0.000000e+00> : vector<8x256xf32>
    %53 = tpu.matmul %50, %52, %cst_65 {dimension_numbers = #tpu.dot_dimension_numbers<[1], [0], [0], [1], [0, 0, 1, 1], [], []>} : vector<8x64xf32>, vector<64x256xf32>, vector<8x256xf32> -> vector<8x256xf32>
    %c0_66 = arith.constant 0 : index
    %c1_67 = arith.constant 1 : index
    %c0_68 = arith.constant 0 : index
    %54 = vector.load %arg14[%c0_66, %c1_67, %c0_68] : memref<1x10x64xf32, #tpu.memory_space<vmem>>, vector<1x8x64xf32>
    %55 = vector.shape_cast %54 : vector<1x8x64xf32> to vector<8x64xf32>
    %c1_69 = arith.constant 1 : index
    %c0_70 = arith.constant 0 : index
    %c0_71 = arith.constant 0 : index
    %56 = vector.load %arg7[%c1_69, %c0_70, %c0_71] : memref<3x64x256xf32, #tpu.memory_space<vmem>>, vector<1x64x256xf32>
    %57 = vector.shape_cast %56 : vector<1x64x256xf32> to vector<64x256xf32>
    %cst_72 = arith.constant dense<0.000000e+00> : vector<8x256xf32>
    %58 = tpu.matmul %55, %57, %cst_72 {dimension_numbers = #tpu.dot_dimension_numbers<[1], [0], [0], [1], [0, 0, 1, 1], [], []>} : vector<8x64xf32>, vector<64x256xf32>, vector<8x256xf32> -> vector<8x256xf32>
    %59 = arith.addf %53, %58 : vector<8x256xf32>
    %c0_73 = arith.constant 0 : index
    %c2_74 = arith.constant 2 : index
    %c0_75 = arith.constant 0 : index
    %60 = vector.load %arg14[%c0_73, %c2_74, %c0_75] : memref<1x10x64xf32, #tpu.memory_space<vmem>>, vector<1x8x64xf32>
    %61 = vector.shape_cast %60 : vector<1x8x64xf32> to vector<8x64xf32>
    %c2_76 = arith.constant 2 : index
    %c0_77 = arith.constant 0 : index
    %c0_78 = arith.constant 0 : index
    %62 = vector.load %arg7[%c2_76, %c0_77, %c0_78] : memref<3x64x256xf32, #tpu.memory_space<vmem>>, vector<1x64x256xf32>
    %63 = vector.shape_cast %62 : vector<1x64x256xf32> to vector<64x256xf32>
    %cst_79 = arith.constant dense<0.000000e+00> : vector<8x256xf32>
    %64 = tpu.matmul %61, %63, %cst_79 {dimension_numbers = #tpu.dot_dimension_numbers<[1], [0], [0], [1], [0, 0, 1, 1], [], []>} : vector<8x64xf32>, vector<64x256xf32>, vector<8x256xf32> -> vector<8x256xf32>
    %65 = arith.addf %59, %64 : vector<8x256xf32>
    %c0_80 = arith.constant 0 : index
    %c0_81 = arith.constant 0 : index
    %66 = vector.load %arg8[%c0_80, %c0_81] : memref<1x256xf32, #tpu.memory_space<vmem>>, vector<1x256xf32>
    %67 = vector.broadcast %66 : vector<1x256xf32> to vector<8x256xf32>
    %68 = arith.mulf %65, %67 : vector<8x256xf32>
    %c0_82 = arith.constant 0 : index
    %c0_83 = arith.constant 0 : index
    %69 = vector.load %arg9[%c0_82, %c0_83] : memref<1x256xf32, #tpu.memory_space<vmem>>, vector<1x256xf32>
    %70 = vector.broadcast %69 : vector<1x256xf32> to vector<8x256xf32>
    %71 = arith.addf %68, %70 : vector<8x256xf32>
    %cst_84 = arith.constant 0.000000e+00 : f32
    %72 = vector.broadcast %cst_84 : f32 to vector<8x256xf32>
    %73 = arith.maximumf %71, %72 : vector<8x256xf32>
    %c0_85 = arith.constant 0 : index
    %c0_86 = arith.constant 0 : index
    %c0_87 = arith.constant 0 : index
    %74 = vector.load %arg10[%c0_85, %c0_86, %c0_87] : memref<2x4x8xf32, #tpu.memory_space<vmem>>, vector<1x4x8xf32>
    %75 = vector.shape_cast %74 : vector<1x4x8xf32> to vector<4x8xf32>
    %cst_88 = arith.constant dense<0.000000e+00> : vector<4x256xf32>
    %76 = tpu.matmul %75, %73, %cst_88 {dimension_numbers = #tpu.dot_dimension_numbers<[1], [0], [0], [1], [0, 0, 1, 1], [], []>} : vector<4x8xf32>, vector<8x256xf32>, vector<4x256xf32> -> vector<4x256xf32>
    %c1_89 = arith.constant 1 : index
    %c0_90 = arith.constant 0 : index
    %c0_91 = arith.constant 0 : index
    %77 = vector.load %arg10[%c1_89, %c0_90, %c0_91] : memref<2x4x8xf32, #tpu.memory_space<vmem>>, vector<1x4x8xf32>
    %78 = vector.shape_cast %77 : vector<1x4x8xf32> to vector<4x8xf32>
    %cst_92 = arith.constant dense<0.000000e+00> : vector<4x256xf32>
    %79 = tpu.matmul %78, %73, %cst_92 {dimension_numbers = #tpu.dot_dimension_numbers<[1], [0], [0], [1], [0, 0, 1, 1], [], []>} : vector<4x8xf32>, vector<8x256xf32>, vector<4x256xf32> -> vector<4x256xf32>
    %80 = arith.maximumf %76, %79 : vector<4x256xf32>
    %c0_93 = arith.constant 0 : index
    %c0_94 = arith.constant 0 : index
    %c0_95 = arith.constant 0 : index
    %81 = vector.load %arg11[%c0_93, %c0_94, %c0_95] : memref<2x256x128xf32, #tpu.memory_space<vmem>>, vector<1x256x128xf32>
    %82 = vector.shape_cast %81 : vector<1x256x128xf32> to vector<256x128xf32>
    %cst_96 = arith.constant dense<0.000000e+00> : vector<4x128xf32>
    %83 = tpu.matmul %80, %82, %cst_96 {dimension_numbers = #tpu.dot_dimension_numbers<[1], [0], [0], [1], [0, 0, 1, 1], [], []>} : vector<4x256xf32>, vector<256x128xf32>, vector<4x128xf32> -> vector<4x128xf32>
    %c1_97 = arith.constant 1 : index
    %c0_98 = arith.constant 0 : index
    %c0_99 = arith.constant 0 : index
    %84 = vector.load %arg11[%c1_97, %c0_98, %c0_99] : memref<2x256x128xf32, #tpu.memory_space<vmem>>, vector<1x256x128xf32>
    %85 = vector.shape_cast %84 : vector<1x256x128xf32> to vector<256x128xf32>
    %cst_100 = arith.constant dense<0.000000e+00> : vector<4x128xf32>
    %86 = tpu.matmul %80, %85, %cst_100 {dimension_numbers = #tpu.dot_dimension_numbers<[1], [0], [0], [1], [0, 0, 1, 1], [], []>} : vector<4x256xf32>, vector<256x128xf32>, vector<4x128xf32> -> vector<4x128xf32>
    %87 = arith.maximumf %83, %86 : vector<4x128xf32>
    %c0_101 = arith.constant 0 : index
    %c0_102 = arith.constant 0 : index
    %c0_103 = arith.constant 0 : index
    %88 = vector.load %arg12[%c0_101, %c0_102, %c0_103] : memref<1x4x128xf32, #tpu.memory_space<vmem>>, vector<1x4x128xf32>
    %89 = vector.shape_cast %88 : vector<1x4x128xf32> to vector<4x128xf32>
    %90 = vector.shape_cast %87 : vector<4x128xf32> to vector<1x4x128xf32>
    tpu.vector_store %arg12[%c0_101, %c0_102, %c0_103], %90 {strides = array<i32>} : memref<1x4x128xf32, #tpu.memory_space<vmem>>, vector<1x4x128xf32>,
    return
  }
  func.func @transform_0(%arg0: i32) -> (i32, i32, i32) {
    %c0_i32 = arith.constant 0 : i32
    %c0_i32_0 = arith.constant 0 : i32
    %c0_i32_1 = arith.constant 0 : i32
    return %arg0, %c0_i32, %c0_i32_0 : i32, i32, i32
  }
  func.func @transform_1(%arg0: i32) -> (i32, i32, i32) {
    %c0_i32 = arith.constant 0 : i32
    %c0_i32_0 = arith.constant 0 : i32
    %c0_i32_1 = arith.constant 0 : i32
    %c0_i32_2 = arith.constant 0 : i32
    return %c0_i32, %c0_i32_0, %c0_i32_1 : i32, i32, i32
  }
  func.func @transform_2(%arg0: i32) -> (i32, i32) {
    %c0_i32 = arith.constant 0 : i32
    %c0_i32_0 = arith.constant 0 : i32
    %c0_i32_1 = arith.constant 0 : i32
    return %c0_i32, %c0_i32_0 : i32, i32
  }
  func.func @transform_3(%arg0: i32) -> (i32, i32) {
    %c0_i32 = arith.constant 0 : i32
    %c0_i32_0 = arith.constant 0 : i32
    %c0_i32_1 = arith.constant 0 : i32
    return %c0_i32, %c0_i32_0 : i32, i32
  }
  func.func @transform_4(%arg0: i32) -> (i32, i32, i32) {
    %c0_i32 = arith.constant 0 : i32
    %c0_i32_0 = arith.constant 0 : i32
    %c0_i32_1 = arith.constant 0 : i32
    %c0_i32_2 = arith.constant 0 : i32
    return %c0_i32, %c0_i32_0, %c0_i32_1 : i32, i32, i32
  }
  func.func @transform_5(%arg0: i32) -> (i32, i32, i32) {
    %c0_i32 = arith.constant 0 : i32
    %c0_i32_0 = arith.constant 0 : i32
    %c0_i32_1 = arith.constant 0 : i32
    %c0_i32_2 = arith.constant 0 : i32
    return %c0_i32, %c0_i32_0, %c0_i32_1 : i32, i32, i32
  }
  func.func @transform_6(%arg0: i32) -> (i32, i32, i32) {
    %c0_i32 = arith.constant 0 : i32
    %c0_i32_0 = arith.constant 0 : i32
    %c0_i32_1 = arith.constant 0 : i32
    %c0_i32_2 = arith.constant 0 : i32
    return %c0_i32, %c0_i32_0, %c0_i32_1 : i32, i32, i32
  }
  func.func @transform_7(%arg0: i32) -> (i32, i32) {
    %c0_i32 = arith.constant 0 : i32
    %c0_i32_0 = arith.constant 0 : i32
    %c0_i32_1 = arith.constant 0 : i32
    return %c0_i32, %c0_i32_0 : i32, i32
  }
  func.func @transform_8(%arg0: i32) -> (i32, i32) {
    %c0_i32 = arith.constant 0 : i32
    %c0_i32_0 = arith.constant 0 : i32
    %c0_i32_1 = arith.constant 0 : i32
    return %c0_i32, %c0_i32_0 : i32, i32
  }
  func.func @transform_9(%arg0: i32) -> (i32, i32, i32) {
    %c0_i32 = arith.constant 0 : i32
    %c0_i32_0 = arith.constant 0 : i32
    %c0_i32_1 = arith.constant 0 : i32
    %c0_i32_2 = arith.constant 0 : i32
    return %c0_i32, %c0_i32_0, %c0_i32_1 : i32, i32, i32
  }
  func.func @transform_10(%arg0: i32) -> (i32, i32, i32) {
    %c0_i32 = arith.constant 0 : i32
    %c0_i32_0 = arith.constant 0 : i32
    %c0_i32_1 = arith.constant 0 : i32
    %c0_i32_2 = arith.constant 0 : i32
    return %c0_i32, %c0_i32_0, %c0_i32_1 : i32, i32, i32
  }
  func.func @transform_11(%arg0: i32) -> (i32, i32, i32) {
    %c0_i32 = arith.constant 0 : i32
    %c0_i32_0 = arith.constant 0 : i32
    %c0_i32_1 = arith.constant 0 : i32
    return %arg0, %c0_i32, %c0_i32_0 : i32, i32, i32
  }
}

</mosaic_0001>

<llo_original>
// kernel: tile.23
$region0: #{tile.23}
  #allocation0 [shape = 's32[1]{0}', space=sflag, size = 0x4, scoped, tag = 'scoped memory for tile.23']
  %s0 = inlined_call_operand.vmem [shape: f32[8], index: 0, kind: input, shape index: {}]
  %s1 = inlined_call_operand.vmem [shape: f32[16,8], index: 1, kind: output, shape index: {}]
  // Predicated region
  $region2: #{tile.23} parent=0 // pred_check
    _
  $region3: #{tile.23} parent=0 // pred_check_branch
    %3 = sbr.rel (0) target = $region5
  $region4: #{tile.23} parent=0 // pred_region
    _
  $region5: #{tile.23} parent=0 // pred_fallthru
    _
  %v4 = vld [vmem:[%s0] ss:$0 sm:$0xff]
  %5 = vst [vmem:[%s1] sm:$0xff] %v4
  %s6 = scalar_lea.vmem %s1, 8
  %7 = vst [vmem:[%s6] sm:$0xff] %v4

// kernel: tile.24
$region0: #{tile.24}
  %s0 = inlined_call_operand.vmem [shape: f32[16,8], index: 0, kind: input, shape index: {}]
  %s1 = inlined_call_operand.vmem [shape: f32[1,128], index: 1, kind: output, shape index: {}]
  $region1: #{tile.24} parent=0
    #allocation0 [shape = 'u8[4096]{0}', space=vmem, size = 0x1000, scoped, tag = 'scoped mem for output reshape']
    %v2 = vld [vmem:[%s0] sm:$0x1]
    %vm3 = vcmask 64512
    %4 = vst.msk [vmem:[#allocation0] sm:$0x1] %vm3, %v2
    %s5 = scalar_lea.vmem %s0, 15
    %v6 = vld [vmem:[%s5] sm:$0x1]
    %7 = vrot.lane.b32.xlu0 %v6, 120
    %v8 = vpop.permute.xlu0 %7
    %vm9 = vcmask 1048512
    %10 = vst.msk [vmem:[#allocation0] sm:$0x1] %vm9, %v8
    %s11 = scalar_lea.vmem %s0, 14
    %v12 = vld [vmem:[%s11] sm:$0x1]
    %13 = vrot.lane.b32.xlu0 %v12, 112
    %v14 = vpop.permute.xlu0 %13
    %vm15 = vcmask 982912
    %16 = vst.msk [vmem:[#allocation0] sm:$0x1] %vm15, %v14
    %s17 = scalar_lea.vmem %s0, 13
    %v18 = vld [vmem:[%s17] sm:$0x1]
    %19 = vrot.lane.b32.xlu0 %v18, 104
    %v20 = vpop.permute.xlu0 %19
    %vm21 = vcmask 917312
    %22 = vst.msk [vmem:[#allocation0] sm:$0x1] %vm21, %v20
    %s23 = scalar_lea.vmem %s0, 12
    %v24 = vld [vmem:[%s23] sm:$0x1]
    %25 = vrot.lane.b32.xlu0 %v24, 96
    %v26 = vpop.permute.xlu0 %25
    %vm27 = vcmask 851712
    %28 = vst.msk [vmem:[#allocation0] sm:$0x1] %vm27, %v26
    %s29 = scalar_lea.vmem %s0, 11
    %v30 = vld [vmem:[%s29] sm:$0x1]
    %31 = vrot.lane.b32.xlu0 %v30, 88
    %v32 = vpop.permute.xlu0 %31
    %vm33 = vcmask 786112
    %34 = vst.msk [vmem:[#allocation0] sm:$0x1] %vm33, %v32
    %s35 = scalar_lea.vmem %s0, 10
    %v36 = vld [vmem:[%s35] sm:$0x1]
    %37 = vrot.lane.b32.xlu0 %v36, 80
    %v38 = vpop.permute.xlu0 %37
    %vm39 = vcmask 720512
    %40 = vst.msk [vmem:[#allocation0] sm:$0x1] %vm39, %v38
    %s41 = scalar_lea.vmem %s0, 9
    %v42 = vld [vmem:[%s41] sm:$0x1]
    %43 = vrot.lane.b32.xlu0 %v42, 72
    %v44 = vpop.permute.xlu0 %43
    %vm45 = vcmask 654912
    %46 = vst.msk [vmem:[#allocation0] sm:$0x1] %vm45, %v44
    %s47 = scalar_lea.vmem %s0, 8
    %v48 = vld [vmem:[%s47] sm:$0x1]
    %49 = vrot.lane.b32.xlu0 %v48, 64
    %v50 = vpop.permute.xlu0 %49
    %vm51 = vcmask 589312
    %52 = vst.msk [vmem:[#allocation0] sm:$0x1] %vm51, %v50
    %s53 = scalar_lea.vmem %s0, 7
    %v54 = vld [vmem:[%s53] sm:$0x1]
    %55 = vrot.lane.b32.xlu0 %v54, 56
    %v56 = vpop.permute.xlu0 %55
    %vm57 = vcmask 523712
    %58 = vst.msk [vmem:[#allocation0] sm:$0x1] %vm57, %v56
    %s59 = scalar_lea.vmem %s0, 6
    %v60 = vld [vmem:[%s59] sm:$0x1]
    %61 = vrot.lane.b32.xlu0 %v60, 48
    %v62 = vpop.permute.xlu0 %61
    %vm63 = vcmask 458112
    %64 = vst.msk [vmem:[#allocation0] sm:$0x1] %vm63, %v62
    %s65 = scalar_lea.vmem %s0, 5
    %v66 = vld [vmem:[%s65] sm:$0x1]
    %67 = vrot.lane.b32.xlu0 %v66, 40
    %v68 = vpop.permute.xlu0 %67
    %vm69 = vcmask 392512
    %70 = vst.msk [vmem:[#allocation0] sm:$0x1] %vm69, %v68
    %s71 = scalar_lea.vmem %s0, 4
    %v72 = vld [vmem:[%s71] sm:$0x1]
    %73 = vrot.lane.b32.xlu0 %v72, 32
    %v74 = vpop.permute.xlu0 %73
    %vm75 = vcmask 326912
    %76 = vst.msk [vmem:[#allocation0] sm:$0x1] %vm75, %v74
    %s77 = scalar_lea.vmem %s0, 3
    %v78 = vld [vmem:[%s77] sm:$0x1]
    %79 = vrot.lane.b32.xlu0 %v78, 24
    %v80 = vpop.permute.xlu0 %79
    %vm81 = vcmask 261312
    %82 = vst.msk [vmem:[#allocation0] sm:$0x1] %vm81, %v80
    %s83 = scalar_lea.vmem %s0, 2
    %v84 = vld [vmem:[%s83] sm:$0x1]
    %85 = vrot.lane.b32.xlu0 %v84, 16
    %v86 = vpop.permute.xlu0 %85
    %vm87 = vcmask 195712
    %88 = vst.msk [vmem:[#allocation0] sm:$0x1] %vm87, %v86
    %s89 = scalar_lea.vmem %s0, 1
    %v90 = vld [vmem:[%s89] sm:$0x1]
    %91 = vrot.lane.b32.xlu0 %v90, 8
    %v92 = vpop.permute.xlu0 %91
    %vm93 = vcmask 130112
    %94 = vst.msk [vmem:[#allocation0] sm:$0x1] %vm93, %v92
    %s96 = ssub.s32 2, 1
    %v97 = vld [vmem:[#allocation0] sm:%s96]
    %s99 = ssub.s32 2, 1
    %100 = vst [vmem:[%s1] sm:%s99] %v97

// kernel: tile.33
$region0: #{tile.33}
  #allocation0 [shape = 's32[1]{0}', space=sflag, size = 0x4, scoped, tag = 'scoped memory for tile.33']
  %s0 = inlined_call_operand.vmem [shape: f32[32], index: 0, kind: input, shape index: {}]
  %s1 = inlined_call_operand.vmem [shape: f32[8,32], index: 1, kind: output, shape index: {}]
  // Predicated region
  $region2: #{tile.33} parent=0 // pred_check
    _
  $region3: #{tile.33} parent=0 // pred_check_branch
    %3 = sbr.rel (0) target = $region5
  $region4: #{tile.33} parent=0 // pred_region
    _
  $region5: #{tile.33} parent=0 // pred_fallthru
    _
  %v4 = vld [vmem:[%s0] ss:$0 sm:$0xff]
  %5 = vst [vmem:[%s1] sm:$0xff] %v4

// kernel: tile.34
$region0: #{tile.34}
  %s0 = inlined_call_operand.vmem [shape: f32[8,32], index: 0, kind: input, shape index: {}]
  %s1 = inlined_call_operand.vmem [shape: f32[1,256], index: 1, kind: output, shape index: {}]
  $region1: #{tile.34} parent=0
    #allocation0 [shape = 'u8[8192]{0}', space=vmem, size = 0x2000, scoped, tag = 'scoped mem for output reshape']
    %s2 = smov 3
    %v3 = vld [vmem:[%s0] ss:$4 sm:%s2]
    %vm4 = vcmask 261120
    %5 = vst.msk [vmem:[#allocation0] ss:$8 sm:$0x3] %vm4, %v3
    %s6 = scalar_lea.vmem %s0, 3
    %s7 = smov 3
    %v8 = vld [vmem:[%s6] ss:$4 sm:%s7]
    %9 = vrot.lane.b32.xlu0 %v8, 96
    %v10 = vpop.permute.xlu0 %9
    %vm11 = vcmask 1048320
    %12 = vst.msk [vmem:[#allocation0] ss:$8 sm:$0x3] %vm11, %v10
    %s13 = scalar_lea.vmem %s0, 2
    %s14 = smov 3
    %v15 = vld [vmem:[%s13] ss:$4 sm:%s14]
    %16 = vrot.lane.b32.xlu0 %v15, 64
    %v17 = vpop.permute.xlu0 %16
    %vm18 = vcmask 785920
    %19 = vst.msk [vmem:[#allocation0] ss:$8 sm:$0x3] %vm18, %v17
    %s20 = scalar_lea.vmem %s0, 1
    %s21 = smov 3
    %v22 = vld [vmem:[%s20] ss:$4 sm:%s21]
    %23 = vrot.lane.b32.xlu0 %v22, 32
    %v24 = vpop.permute.xlu0 %23
    %vm25 = vcmask 523520
    %26 = vst.msk [vmem:[#allocation0] ss:$8 sm:$0x3] %vm25, %v24
    %s28 = ssub.s32 2, 1
    %v29 = vld [vmem:[#allocation0] sm:%s28]
    %s31 = ssub.s32 2, 1
    %32 = vst [vmem:[%s1] sm:%s31] %v29
    %s33 = scalar_lea.vmem [#allocation0], 8
    %v34 = vld [vmem:[%s33] sm:%s28]
    %s36 = ssub.s32 2, 1
    %s37 = scalar_lea.vmem %s1, 1
    %38 = vst [vmem:[%s37] sm:%s36] %v34

// kernel: cnn_layers_forward.1
$region0: #{cnn_layers_forward.1}
  #allocation0 [shape = 'u32[]', space=smem, size = 0x4, offset = 0x4, fixed_abs, tag = 'smem constant byte address 0x4 - core index']
  #allocation1 [shape = 'u32[72,128]{1,0:T(1,128)}', space=vmem, size = 0x9000, scoped, tag = 'internal scratch']
  #allocation2 [shape = 'f32[1,18,64]{2,1,0:T(8,128)}', space=vmem, size = 0x3000, scoped, tag = 'scratch operand']
  #allocation3 [shape = 'f32[1,10,64]{2,1,0:T(8,128)}', space=vmem, size = 0x2000, scoped, tag = 'scratch operand']
  %s0 = inlined_call_operand.vmem [shape: f32[2,16,64], index: 0, kind: input, shape index: {}]
  %s1 = inlined_call_operand.vmem [shape: f32[3,64,128], index: 1, kind: input, shape index: {}]
  %s2 = inlined_call_operand.vmem [shape: f32[1,128], index: 2, kind: input, shape index: {}]
  %s3 = inlined_call_operand.vmem [shape: f32[1,128], index: 3, kind: input, shape index: {}]
  %s4 = inlined_call_operand.vmem [shape: f32[2,8,16], index: 4, kind: input, shape index: {}]
  %s5 = inlined_call_operand.vmem [shape: f32[2,128,64], index: 5, kind: input, shape index: {}]
  %s6 = inlined_call_operand.vmem [shape: f32[3,64,256], index: 6, kind: input, shape index: {}]
  %s7 = inlined_call_operand.vmem [shape: f32[1,256], index: 7, kind: input, shape index: {}]
  %s8 = inlined_call_operand.vmem [shape: f32[1,256], index: 8, kind: input, shape index: {}]
  %s9 = inlined_call_operand.vmem [shape: f32[2,4,8], index: 9, kind: input, shape index: {}]
  %s10 = inlined_call_operand.vmem [shape: f32[2,256,128], index: 10, kind: input, shape index: {}]
  %s11 = inlined_call_operand.vmem [shape: f32[2,4,128], index: 11, kind: output, shape index: {}]
  %s12 = sld [smem:[#allocation0]]
  $region77: #{cnn_layers_forward.1} parent=0
    _
  %s14 = ssub.s32 1, %s12
  %s15 = scalar_select 0, %s14, %s12
  loop: start=0, step=1, limit=4
  $region2: #{cnn_layers_forward.1} parent=0 // loop_pre_header
    _
  $region3: #{cnn_layers_forward.1} parent=0 // loop_header
    %s17 = sphi 0, %s21
    %p18 = scmp.ge.s32.totalorder %s17, 4
    %s27 = sphi 0, %s29
    %s30 = sphi 0, %s27
    %s31 = sphi 0, %s30
    %s47 = sphi 0, %s31
    %s51 = sphi 0, %s51
    %s53 = sphi 0, %s51
    %s54 = sphi 0, %s53
    %s68 = sphi 0, %s54
    %s72 = sphi 0, %s72
    %s74 = sphi 0, %s72
    %s75 = sphi 0, %s74
    %s89 = sphi 0, %s75
    %s93 = sphi 0, %s93
    %s95 = sphi 0, %s93
    %s96 = sphi 0, %s95
    %s110 = sphi 0, %s96
    %s114 = sphi 0, %s114
    %s116 = sphi 0, %s114
    %s117 = sphi 0, %s116
    %s131 = sphi 0, %s117
    %s135 = sphi 0, %s135
    %s137 = sphi 0, %s135
    %s138 = sphi 0, %s137
    %s152 = sphi 0, %s138
    %s156 = sphi 0, %s156
    %s158 = sphi 0, %s156
    %s159 = sphi 0, %s158
    %s173 = sphi 0, %s159
    %s177 = sphi 0, %s177
    %s179 = sphi 0, %s177
    %s180 = sphi 0, %s179
    %s194 = sphi 0, %s180
    %s198 = sphi 0, %s198
    %s200 = sphi 0, %s198
    %s201 = sphi 0, %s200
    %s215 = sphi 0, %s201
    %s219 = sphi 0, %s219
    %s221 = sphi 0, %s219
    %s222 = sphi 0, %s221
    %s236 = sphi 0, %s222
    %s240 = sphi 0, %s240
    %s242 = sphi 0, %s240
    %s243 = sphi 0, %s242
    %s257 = sphi 0, %s243
    %s263 = sphi 0, %s265
    %s266 = sphi 0, %s263
    %s267 = sphi 0, %s266
    %s283 = sphi 0, %s267
  $region4: #{cnn_layers_forward.1} parent=0 // loop_header_branch
    %20 = sbr.rel (%p18) target = $region8
  $region5: #{cnn_layers_forward.1} parent=0 // loop_body
    %s22 = ssub.s32 %s17, 1
    %s23 = ssub.s32 %s17, 2
    %s24 = sadd.s32 %s17, 1
    %s25 = ssub.s32 %s17, %s24
    %p26 = scmp.eq.s32.totalorder %s25, 0
    %s28 = sadd.s32 %s27, 1
    %s29 = scalar_select %p26, %s27, %s28
    %p32 = pneg %p26
    %p33 = scmp.eq.s32.totalorder %s17, 1
    %p34 = por %p32, %p33
    %p35 = scmp.ne.s32.totalorder %s27, %s30
    %p36 = scmp.eq.s32.totalorder %s17, 0
    %p37 = por %p35, %p36
    %p38 = scmp.ne.s32.totalorder %s27, %s30
    %p39 = scmp.eq.s32.totalorder %s22, 1
    %p40 = por %p38, %p39
    %p41 = scmp.ne.s32.totalorder %s30, %s31
    %p42 = scmp.eq.s32.totalorder %s22, 0
    %p43 = por %p41, %p42
    %p44 = scmp.ne.s32.totalorder %s30, %s31
    %p45 = scmp.eq.s32.totalorder %s23, 1
    %p46 = por %p44, %p45
    %p48 = scmp.ne.s32.totalorder %s31, %s47
    %p49 = scmp.eq.s32.totalorder %s23, 0
    %p50 = por %p48, %p49
    %s52 = sadd.s32 %s51, 1
    %p55 = scmp.eq.s32.totalorder %s17, 1
    %p56 = scmp.ne.s32.totalorder %s51, %s53
    %p57 = scmp.eq.s32.totalorder %s17, 0
    %p58 = por %p56, %p57
    %p59 = scmp.ne.s32.totalorder %s51, %s53
    %p60 = scmp.eq.s32.totalorder %s22, 1
    %p61 = por %p59, %p60
    %p62 = scmp.ne.s32.totalorder %s53, %s54
    %p63 = scmp.eq.s32.totalorder %s22, 0
    %p64 = por %p62, %p63
    %p65 = scmp.ne.s32.totalorder %s53, %s54
    %p66 = scmp.eq.s32.totalorder %s23, 1
    %p67 = por %p65, %p66
    %p69 = scmp.ne.s32.totalorder %s54, %s68
    %p70 = scmp.eq.s32.totalorder %s23, 0
    %p71 = por %p69, %p70
    %s73 = sadd.s32 %s72, 1
    %p76 = scmp.eq.s32.totalorder %s17, 1
    %p77 = scmp.ne.s32.totalorder %s72, %s74
    %p78 = scmp.eq.s32.totalorder %s17, 0
    %p79 = por %p77, %p78
    %p80 = scmp.ne.s32.totalorder %s72, %s74
    %p81 = scmp.eq.s32.totalorder %s22, 1
    %p82 = por %p80, %p81
    %p83 = scmp.ne.s32.totalorder %s74, %s75
    %p84 = scmp.eq.s32.totalorder %s22, 0
    %p85 = por %p83, %p84
    %p86 = scmp.ne.s32.totalorder %s74, %s75
    %p87 = scmp.eq.s32.totalorder %s23, 1
    %p88 = por %p86, %p87
    %p90 = scmp.ne.s32.totalorder %s75, %s89
    %p91 = scmp.eq.s32.totalorder %s23, 0
    %p92 = por %p90, %p91
    %s94 = sadd.s32 %s93, 1
    %p97 = scmp.eq.s32.totalorder %s17, 1
    %p98 = scmp.ne.s32.totalorder %s93, %s95
    %p99 = scmp.eq.s32.totalorder %s17, 0
    %p100 = por %p98, %p99
    %p101 = scmp.ne.s32.totalorder %s93, %s95
    %p102 = scmp.eq.s32.totalorder %s22, 1
    %p103 = por %p101, %p102
    %p104 = scmp.ne.s32.totalorder %s95, %s96
    %p105 = scmp.eq.s32.totalorder %s22, 0
    %p106 = por %p104, %p105
    %p107 = scmp.ne.s32.totalorder %s95, %s96
    %p108 = scmp.eq.s32.totalorder %s23, 1
    %p109 = por %p107, %p108
    %p111 = scmp.ne.s32.totalorder %s96, %s110
    %p112 = scmp.eq.s32.totalorder %s23, 0
    %p113 = por %p111, %p112
    %s115 = sadd.s32 %s114, 1
    %p118 = scmp.eq.s32.totalorder %s17, 1
    %p119 = scmp.ne.s32.totalorder %s114, %s116
    %p120 = scmp.eq.s32.totalorder %s17, 0
    %p121 = por %p119, %p120
    %p122 = scmp.ne.s32.totalorder %s114, %s116
    %p123 = scmp.eq.s32.totalorder %s22, 1
    %p124 = por %p122, %p123
    %p125 = scmp.ne.s32.totalorder %s116, %s117
    %p126 = scmp.eq.s32.totalorder %s22, 0
    %p127 = por %p125, %p126
    %p128 = scmp.ne.s32.totalorder %s116, %s117
    %p129 = scmp.eq.s32.totalorder %s23, 1
    %p130 = por %p128, %p129
    %p132 = scmp.ne.s32.totalorder %s117, %s131
    %p133 = scmp.eq.s32.totalorder %s23, 0
    %p134 = por %p132, %p133
    %s136 = sadd.s32 %s135, 1
    %p139 = scmp.eq.s32.totalorder %s17, 1
    %p140 = scmp.ne.s32.totalorder %s135, %s137
    %p141 = scmp.eq.s32.totalorder %s17, 0
    %p142 = por %p140, %p141
    %p143 = scmp.ne.s32.totalorder %s135, %s137
    %p144 = scmp.eq.s32.totalorder %s22, 1
    %p145 = por %p143, %p144
    %p146 = scmp.ne.s32.totalorder %s137, %s138
    %p147 = scmp.eq.s32.totalorder %s22, 0
    %p148 = por %p146, %p147
    %p149 = scmp.ne.s32.totalorder %s137, %s138
    %p150 = scmp.eq.s32.totalorder %s23, 1
    %p151 = por %p149, %p150
    %p153 = scmp.ne.s32.totalorder %s138, %s152
    %p154 = scmp.eq.s32.totalorder %s23, 0
    %p155 = por %p153, %p154
    %s157 = sadd.s32 %s156, 1
    %p160 = scmp.eq.s32.totalorder %s17, 1
    %p161 = scmp.ne.s32.totalorder %s156, %s158
    %p162 = scmp.eq.s32.totalorder %s17, 0
    %p163 = por %p161, %p162
    %p164 = scmp.ne.s32.totalorder %s156, %s158
    %p165 = scmp.eq.s32.totalorder %s22, 1
    %p166 = por %p164, %p165
    %p167 = scmp.ne.s32.totalorder %s158, %s159
    %p168 = scmp.eq.s32.totalorder %s22, 0
    %p169 = por %p167, %p168
    %p170 = scmp.ne.s32.totalorder %s158, %s159
    %p171 = scmp.eq.s32.totalorder %s23, 1
    %p172 = por %p170, %p171
    %p174 = scmp.ne.s32.totalorder %s159, %s173
    %p175 = scmp.eq.s32.totalorder %s23, 0
    %p176 = por %p174, %p175
    %s178 = sadd.s32 %s177, 1
    %p181 = scmp.eq.s32.totalorder %s17, 1
    %p182 = scmp.ne.s32.totalorder %s177, %s179
    %p183 = scmp.eq.s32.totalorder %s17, 0
    %p184 = por %p182, %p183
    %p185 = scmp.ne.s32.totalorder %s177, %s179
    %p186 = scmp.eq.s32.totalorder %s22, 1
    %p187 = por %p185, %p186
    %p188 = scmp.ne.s32.totalorder %s179, %s180
    %p189 = scmp.eq.s32.totalorder %s22, 0
    %p190 = por %p188, %p189
    %p191 = scmp.ne.s32.totalorder %s179, %s180
    %p192 = scmp.eq.s32.totalorder %s23, 1
    %p193 = por %p191, %p192
    %p195 = scmp.ne.s32.totalorder %s180, %s194
    %p196 = scmp.eq.s32.totalorder %s23, 0
    %p197 = por %p195, %p196
    %s199 = sadd.s32 %s198, 1
    %p202 = scmp.eq.s32.totalorder %s17, 1
    %p203 = scmp.ne.s32.totalorder %s198, %s200
    %p204 = scmp.eq.s32.totalorder %s17, 0
    %p205 = por %p203, %p204
    %p206 = scmp.ne.s32.totalorder %s198, %s200
    %p207 = scmp.eq.s32.totalorder %s22, 1
    %p208 = por %p206, %p207
    %p209 = scmp.ne.s32.totalorder %s200, %s201
    %p210 = scmp.eq.s32.totalorder %s22, 0
    %p211 = por %p209, %p210
    %p212 = scmp.ne.s32.totalorder %s200, %s201
    %p213 = scmp.eq.s32.totalorder %s23, 1
    %p214 = por %p212, %p213
    %p216 = scmp.ne.s32.totalorder %s201, %s215
    %p217 = scmp.eq.s32.totalorder %s23, 0
    %p218 = por %p216, %p217
    %s220 = sadd.s32 %s219, 1
    %p223 = scmp.eq.s32.totalorder %s17, 1
    %p224 = scmp.ne.s32.totalorder %s219, %s221
    %p225 = scmp.eq.s32.totalorder %s17, 0
    %p226 = por %p224, %p225
    %p227 = scmp.ne.s32.totalorder %s219, %s221
    %p228 = scmp.eq.s32.totalorder %s22, 1
    %p229 = por %p227, %p228
    %p230 = scmp.ne.s32.totalorder %s221, %s222
    %p231 = scmp.eq.s32.totalorder %s22, 0
    %p232 = por %p230, %p231
    %p233 = scmp.ne.s32.totalorder %s221, %s222
    %p234 = scmp.eq.s32.totalorder %s23, 1
    %p235 = por %p233, %p234
    %p237 = scmp.ne.s32.totalorder %s222, %s236
    %p238 = scmp.eq.s32.totalorder %s23, 0
    %p239 = por %p237, %p238
    %s241 = sadd.s32 %s240, 1
    %p244 = scmp.eq.s32.totalorder %s17, 1
    %p245 = scmp.ne.s32.totalorder %s240, %s242
    %p246 = scmp.eq.s32.totalorder %s17, 0
    %p247 = por %p245, %p246
    %p248 = scmp.ne.s32.totalorder %s240, %s242
    %p249 = scmp.eq.s32.totalorder %s22, 1
    %p250 = por %p248, %p249
    %p251 = scmp.ne.s32.totalorder %s242, %s243
    %p252 = scmp.eq.s32.totalorder %s22, 0
    %p253 = por %p251, %p252
    %p254 = scmp.ne.s32.totalorder %s242, %s243
    %p255 = scmp.eq.s32.totalorder %s23, 1
    %p256 = por %p254, %p255
    %p258 = scmp.ne.s32.totalorder %s243, %s257
    %p259 = scmp.eq.s32.totalorder %s23, 0
    %p260 = por %p258, %p259
    %s261 = ssub.s32 %s17, %s24
    %p262 = scmp.eq.s32.totalorder %s261, 0
    %s264 = sadd.s32 %s263, 1
    %s265 = scalar_select %p262, %s263, %s264
    %p268 = pneg %p262
    %p269 = scmp.eq.s32.totalorder %s17, 1
    %p270 = por %p268, %p269
    %p271 = scmp.ne.s32.totalorder %s263, %s266
    %p272 = scmp.eq.s32.totalorder %s17, 0
    %p273 = por %p271, %p272
    %p274 = scmp.ne.s32.totalorder %s263, %s266
    %p275 = scmp.eq.s32.totalorder %s22, 1
    %p276 = por %p274, %p275
    %p277 = scmp.ne.s32.totalorder %s266, %s267
    %p278 = scmp.eq.s32.totalorder %s22, 0
    %p279 = por %p277, %p278
    %p280 = scmp.ne.s32.totalorder %s266, %s267
    %p281 = scmp.eq.s32.totalorder %s23, 1
    %p282 = por %p280, %p281
    %p284 = scmp.ne.s32.totalorder %s267, %s283
    %p285 = scmp.eq.s32.totalorder %s23, 0
    %p286 = por %p284, %p285
    %p287 = scmp.le.s32.totalorder 1, %s17
    %p288 = scmp.lt.s32.totalorder %s17, 3
    %p289 = pnand %p287, %p288
    %p290 = pneg %p289
    // Predicated region
    $region9: #{cnn_layers_forward.1} parent=5 // pred_check
      _
    $region10: #{cnn_layers_forward.1} parent=5 // pred_check_branch
      %292 = sbr.rel (%p289) target = $region12
    $region11: #{cnn_layers_forward.1} parent=5 // pred_region
      %s293 = ssub.s32 %s17, 1
      // Predicated region
      $region13: #{cnn_layers_forward.1} parent=11 // pred_check
        %p294 = pneg %p64
      $region14: #{cnn_layers_forward.1} parent=11 // pred_check_branch
        %296 = sbr.rel (%p294) target = $region16
      $region15: #{cnn_layers_forward.1} parent=11 // pred_region
        _
      $region16: #{cnn_layers_forward.1} parent=11 // pred_fallthru
        _
      // Predicated region
      $region17: #{cnn_layers_forward.1} parent=11 // pred_check
        %p297 = pneg %p85
      $region18: #{cnn_layers_forward.1} parent=11 // pred_check_branch
        %299 = sbr.rel (%p297) target = $region20
      $region19: #{cnn_layers_forward.1} parent=11 // pred_region
        _
      $region20: #{cnn_layers_forward.1} parent=11 // pred_fallthru
        _
      // Predicated region
      $region21: #{cnn_layers_forward.1} parent=11 // pred_check
        %p300 = pneg %p106
      $region22: #{cnn_layers_forward.1} parent=11 // pred_check_branch
        %302 = sbr.rel (%p300) target = $region24
      $region23: #{cnn_layers_forward.1} parent=11 // pred_region
        _
      $region24: #{cnn_layers_forward.1} parent=11 // pred_fallthru
        _
      // Predicated region
      $region25: #{cnn_layers_forward.1} parent=11 // pred_check
        %p303 = pneg %p127
      $region26: #{cnn_layers_forward.1} parent=11 // pred_check_branch
        %305 = sbr.rel (%p303) target = $region28
      $region27: #{cnn_layers_forward.1} parent=11 // pred_region
        _
      $region28: #{cnn_layers_forward.1} parent=11 // pred_fallthru
        _
      // Predicated region
      $region29: #{cnn_layers_forward.1} parent=11 // pred_check
        %p306 = pneg %p148
      $region30: #{cnn_layers_forward.1} parent=11 // pred_check_branch
        %308 = sbr.rel (%p306) target = $region32
      $region31: #{cnn_layers_forward.1} parent=11 // pred_region
        _
      $region32: #{cnn_layers_forward.1} parent=11 // pred_fallthru
        _
      // Predicated region
      $region33: #{cnn_layers_forward.1} parent=11 // pred_check
        %p309 = pneg %p169
      $region34: #{cnn_layers_forward.1} parent=11 // pred_check_branch
        %311 = sbr.rel (%p309) target = $region36
      $region35: #{cnn_layers_forward.1} parent=11 // pred_region
        _
      $region36: #{cnn_layers_forward.1} parent=11 // pred_fallthru
        _
      // Predicated region
      $region37: #{cnn_layers_forward.1} parent=11 // pred_check
        %p312 = pneg %p190
      $region38: #{cnn_layers_forward.1} parent=11 // pred_check_branch
        %314 = sbr.rel (%p312) target = $region40
      $region39: #{cnn_layers_forward.1} parent=11 // pred_region
        _
      $region40: #{cnn_layers_forward.1} parent=11 // pred_fallthru
        _
      // Predicated region
      $region41: #{cnn_layers_forward.1} parent=11 // pred_check
        %p315 = pneg %p211
      $region42: #{cnn_layers_forward.1} parent=11 // pred_check_branch
        %317 = sbr.rel (%p315) target = $region44
      $region43: #{cnn_layers_forward.1} parent=11 // pred_region
        _
      $region44: #{cnn_layers_forward.1} parent=11 // pred_fallthru
        _
      // Predicated region
      $region45: #{cnn_layers_forward.1} parent=11 // pred_check
        %p318 = pneg %p232
      $region46: #{cnn_layers_forward.1} parent=11 // pred_check_branch
        %320 = sbr.rel (%p318) target = $region48
      $region47: #{cnn_layers_forward.1} parent=11 // pred_region
        _
      $region48: #{cnn_layers_forward.1} parent=11 // pred_fallthru
        _
      // Predicated region
      $region49: #{cnn_layers_forward.1} parent=11 // pred_check
        %p321 = pneg %p253
      $region50: #{cnn_layers_forward.1} parent=11 // pred_check_branch
        %323 = sbr.rel (%p321) target = $region52
      $region51: #{cnn_layers_forward.1} parent=11 // pred_region
        _
      $region52: #{cnn_layers_forward.1} parent=11 // pred_fallthru
        _
    $region12: #{cnn_layers_forward.1} parent=5 // pred_fallthru
      _
    %p324 = scmp.lt.s32.totalorder %s17, 2
    // Predicated region
    $region53: #{cnn_layers_forward.1} parent=5 // pred_check
      %p325 = pneg %p324
    $region54: #{cnn_layers_forward.1} parent=5 // pred_check_branch
      %327 = sbr.rel (%p325) target = $region56
    $region55: #{cnn_layers_forward.1} parent=5 // pred_region
      // Predicated region
      $region57: #{cnn_layers_forward.1} parent=55 // pred_check
        %p328 = pneg %p37
      $region58: #{cnn_layers_forward.1} parent=55 // pred_check_branch
        %330 = sbr.rel (%p328) target = $region60
      $region59: #{cnn_layers_forward.1} parent=55 // pred_region
        %p331 = scmp.lt.s32.totalorder %s17, 1
        %s332 = scalar_select %p331, %s17, 1
        %s333 = smul.addr %s332, 2
        %s334 = smul.addr %s333, 8
        %s335 = scalar_lea.vmem %s0, %s334
      $region60: #{cnn_layers_forward.1} parent=55 // pred_fallthru
        _
    $region56: #{cnn_layers_forward.1} parent=5 // pred_fallthru
      _
    %p336 = scmp.le.s32.totalorder 1, %s17
    %p337 = scmp.lt.s32.totalorder %s17, 3
    %p338 = pnand %p336, %p337
    %p339 = pneg %p338
    // Predicated region
    $region61: #{cnn_layers_forward.1} parent=5 // pred_check
      _
    $region62: #{cnn_layers_forward.1} parent=5 // pred_check_branch
      %341 = sbr.rel (%p338) target = $region64
    $region63: #{cnn_layers_forward.1} parent=5 // pred_region
      %s342 = ssub.s32 %s17, 1
      %p343 = scmp.lt.s32.totalorder %s22, 1
      %s344 = scalar_select %p343, %s22, 1
      %s345 = smul.addr %s344, 2
      %s346 = smul.addr %s345, 8
      %s347 = scalar_lea.vmem %s0, %s346
      %p348 = pneg %p43
      %p349 = pneg %p40
      %p350 = pneg %p64
      %p351 = pneg %p61
      %p352 = pneg %p85
      %p353 = pneg %p82
      %p354 = pneg %p106
      %p355 = pneg %p103
      %p356 = pneg %p127
      %p357 = pneg %p124
      %p358 = pneg %p148
      %p359 = pneg %p145
      %p360 = pneg %p169
      %p361 = pneg %p166
      %p362 = pneg %p190
      %p363 = pneg %p187
      %p364 = pneg %p211
      %p365 = pneg %p208
      %p366 = pneg %p232
      %p367 = pneg %p229
      %p368 = pneg %p253
      %p369 = pneg %p250
      %p370 = pneg %p279
      %p371 = pneg %p276
      %p372 = scmp.lt.s32.totalorder %s22, 1
      %s373 = scalar_select %p372, %s22, 1
      %s374 = smul.addr %s373, 4
      %s375 = scalar_lea.vmem %s11, %s374
      %p376 = scmp.lt.s32.totalorder %s22, 1
      %s377 = scalar_select %p376, %s22, 1
      %s378 = smul.addr %s377, 2
      %s379 = smul.addr %s378, 8
      %s380 = scalar_lea.vmem %s0, %s379
      %p381 = scmp.lt.s32.totalorder %s22, 1
      %s382 = scalar_select %p381, %s22, 1
      %s383 = smul.addr %s382, 4
      %s384 = scalar_lea.vmem %s11, %s383
      %vm385 = vcmask 516096
      %386 = vst.msk [vmem:[#allocation2] sm:$0x1] %vm385, 0.0
      %387 = vst.msk [vmem:[#allocation2 + $0x11] sm:$0x1] %vm385, 0.0
      %v388 = vld [vmem:[%s380] sm:$0xff]
      %v389 = vld [vmem:[%s380 + $0x8] sm:$0xff]
      %vm390 = vcmask 523264
      %391 = vst.msk [vmem:[#allocation2 + $0x1] sm:$0xff] %vm390, %v388
      %392 = vst.msk [vmem:[#allocation2 + $0x9] sm:$0xff] %vm390, %v389
      %v393 = vld [vmem:[#allocation2] sm:$0xff]
      %v394 = vld [vmem:[#allocation2 + $0x8] sm:$0xff]
      %v395 = vld [vmem:[%s1] sm:$0xff]
      %v396 = vld [vmem:[%s1 + $0x8] sm:$0xff]
      %v397 = vld [vmem:[%s1 + $0x10] sm:$0xff]
      %v398 = vld [vmem:[%s1 + $0x18] sm:$0xff]
      %v399 = vld [vmem:[%s1 + $0x20] sm:$0xff]
      %v400 = vld [vmem:[%s1 + $0x28] sm:$0xff]
      %v401 = vld [vmem:[%s1 + $0x30] sm:$0xff]
      %v402 = vld [vmem:[%s1 + $0x38] sm:$0xff]
      %v403 = vld [vmem:[#allocation2 + $0x1] sm:$0xff]
      %v404 = vld [vmem:[#allocation2 + $0x9] sm:$0xff]
      %s405 = scalar_lea.vmem %s1, 64
      %v406 = vld [vmem:[%s405] sm:$0xff]
      %v407 = vld [vmem:[%s405 + $0x8] sm:$0xff]
      %v408 = vld [vmem:[%s405 + $0x10] sm:$0xff]
      %v409 = vld [vmem:[%s405 + $0x18] sm:$0xff]
      %v410 = vld [vmem:[%s405 + $0x20] sm:$0xff]
      %v411 = vld [vmem:[%s405 + $0x28] sm:$0xff]
      %v412 = vld [vmem:[%s405 + $0x30] sm:$0xff]
      %v413 = vld [vmem:[%s405 + $0x38] sm:$0xff]
      %v415 = vsel %vm390, %v403, 0
      %v418 = vsel %vm390, %v404, 0
      %420 = vmatpush.msra.mxu0 0.0
      %421 = vmatpush.msra.mxu0 0.0
      %422 = vmatpush.msra.mxu0 0.0
      %423 = vmatpush.msra.mxu0 0.0
      %424 = vmatpush.msra.mxu0 0.0
      %425 = vmatpush.msra.mxu0 0.0
      %426 = vmatpush.msra.mxu0 0.0
      %427 = vmatpush.msra.mxu0 0.0
      %428 = vmatpush.msra.mxu0 %v413
      %429 = vmatpush.msra.mxu0 %v412
      %430 = vmatpush.msra.mxu0 %v411
      %431 = vmatpush.msra.mxu0 %v410
      %432 = vmatpush.msra.mxu0 %v409
      %433 = vmatpush.msra.mxu0 %v408
      %434 = vmatpush.msra.mxu0 %v407
      %435 = vmatpush.msra.mxu0 %v406
      %436 = vmatmul.f32.gmra.mxu0 %v415
      %v437 = vpop.f32.mrf.mxu0
      %v438 = vadd.f32 0.0, %v437
      %439 = vmatmul.f32.gmra.mxu0 %v418
      %v440 = vpop.f32.mrf.mxu0
      %v441 = vadd.f32 0.0, %v440
      %442 = vdwg.mxu0
      %v444 = vsel %vm390, %v393, 0
      %v447 = vsel %vm390, %v394, 0
      %449 = vmatpush.msra.mxu0 0.0
      %450 = vmatpush.msra.mxu0 0.0
      %451 = vmatpush.msra.mxu0 0.0
      %452 = vmatpush.msra.mxu0 0.0
      %453 = vmatpush.msra.mxu0 0.0
      %454 = vmatpush.msra.mxu0 0.0
      %455 = vmatpush.msra.mxu0 0.0
      %456 = vmatpush.msra.mxu0 0.0
      %457 = vmatpush.msra.mxu0 %v402
      %458 = vmatpush.msra.mxu0 %v401
      %459 = vmatpush.msra.mxu0 %v400
      %460 = vmatpush.msra.mxu0 %v399
      %461 = vmatpush.msra.mxu0 %v398
      %462 = vmatpush.msra.mxu0 %v397
      %463 = vmatpush.msra.mxu0 %v396
      %464 = vmatpush.msra.mxu0 %v395
      %465 = vmatmul.f32.gmra.mxu0 %v444
      %v466 = vpop.f32.mrf.mxu0
      %v467 = vadd.f32 %v438, %v466
      %468 = vmatmul.f32.gmra.mxu0 %v447
      %v469 = vpop.f32.mrf.mxu0
      %v470 = vadd.f32 %v441, %v469
      %471 = vdwg.mxu0
      %v472 = vld [vmem:[#allocation2 + $0x2] sm:$0xff]
      %v473 = vld [vmem:[#allocation2 + $0xa] sm:$0xff]
      %s474 = scalar_lea.vmem %s1, 128
      %v475 = vld [vmem:[%s474] sm:$0xff]
      %v476 = vld [vmem:[%s474 + $0x8] sm:$0xff]
      %v477 = vld [vmem:[%s474 + $0x10] sm:$0xff]
      %v478 = vld [vmem:[%s474 + $0x18] sm:$0xff]
      %v479 = vld [vmem:[%s474 + $0x20] sm:$0xff]
      %v480 = vld [vmem:[%s474 + $0x28] sm:$0xff]
      %v481 = vld [vmem:[%s474 + $0x30] sm:$0xff]
      %v482 = vld [vmem:[%s474 + $0x38] sm:$0xff]
      %v484 = vsel %vm390, %v472, 0
      %v487 = vsel %vm390, %v473, 0
      %489 = vmatpush.msra.mxu0 0.0
      %490 = vmatpush.msra.mxu0 0.0
      %491 = vmatpush.msra.mxu0 0.0
      %492 = vmatpush.msra.mxu0 0.0
      %493 = vmatpush.msra.mxu0 0.0
      %494 = vmatpush.msra.mxu0 0.0
      %495 = vmatpush.msra.mxu0 0.0
      %496 = vmatpush.msra.mxu0 0.0
      %497 = vmatpush.msra.mxu0 %v482
      %498 = vmatpush.msra.mxu0 %v481
      %499 = vmatpush.msra.mxu0 %v480
      %500 = vmatpush.msra.mxu0 %v479
      %501 = vmatpush.msra.mxu0 %v478
      %502 = vmatpush.msra.mxu0 %v477
      %503 = vmatpush.msra.mxu0 %v476
      %504 = vmatpush.msra.mxu0 %v475
      %505 = vmatmul.f32.gmra.mxu0 %v484
      %v506 = vpop.f32.mrf.mxu0
      %v507 = vadd.f32 0.0, %v506
      %508 = vmatmul.f32.gmra.mxu0 %v487
      %v509 = vpop.f32.mrf.mxu0
      %v510 = vadd.f32 0.0, %v509
      %511 = vdwg.mxu0
      %v512 = vadd.f32 %v467, %v507
      %v513 = vadd.f32 %v470, %v510
      %v514 = vld [vmem:[%s2] sm:$0x1]
      %v516 = vperm.slane %v514, 0
      %v518 = vmul.f32 %v512, %v516
      %v519 = vmul.f32 %v513, %v516
      %v520 = vld [vmem:[%s3] sm:$0x1]
      %v522 = vperm.slane %v520, 0
      %v524 = vadd.f32 %v518, %v522
      %v525 = vadd.f32 %v519, %v522
      %v526 = vmax.f32 %v524, 0.0
      %v527 = vmax.f32 %v525, 0.0
      %v528 = vld [vmem:[%s4] sm:$0xff]
      %vm529 = vcmask 130048
      %v531 = vsel %vm529, %v528, 0
      %533 = vmatpush.msra.mxu0 0.0
      %534 = vmatpush.msra.mxu0 0.0
      %535 = vmatpush.msra.mxu0 0.0
      %536 = vmatpush.msra.mxu0 0.0
      %537 = vmatpush.msra.mxu0 0.0
      %538 = vmatpush.msra.mxu0 0.0
      %539 = vmatpush.msra.mxu0 0.0
      %540 = vmatpush.msra.mxu0 0.0
      %541 = vmatpush.msra.mxu0 0.0
      %542 = vmatpush.msra.mxu0 0.0
      %543 = vmatpush.msra.mxu0 0.0
      %544 = vmatpush.msra.mxu0 0.0
      %545 = vmatpush.msra.mxu0 0.0
      %546 = vmatpush.msra.mxu0 0.0
      %547 = vmatpush.msra.mxu0 %v527
      %548 = vmatpush.msra.mxu0 %v526
      %549 = vmatmul.f32.gmra.mxu0 %v531
      %v550 = vpop.f32.mrf.mxu0
      %v551 = vadd.f32 0.0, %v550
      %552 = vdwg.mxu0
      %s553 = scalar_lea.vmem %s4, 8
      %v554 = vld [vmem:[%s553] sm:$0xff]
      %v556 = vsel %vm529, %v554, 0
      %558 = vmatpush.msra.mxu0 0.0
      %559 = vmatpush.msra.mxu0 0.0
      %560 = vmatpush.msra.mxu0 0.0
      %561 = vmatpush.msra.mxu0 0.0
      %562 = vmatpush.msra.mxu0 0.0
      %563 = vmatpush.msra.mxu0 0.0
      %564 = vmatpush.msra.mxu0 0.0
      %565 = vmatpush.msra.mxu0 0.0
      %566 = vmatpush.msra.mxu0 0.0
      %567 = vmatpush.msra.mxu0 0.0
      %568 = vmatpush.msra.mxu0 0.0
      %569 = vmatpush.msra.mxu0 0.0
      %570 = vmatpush.msra.mxu0 0.0
      %571 = vmatpush.msra.mxu0 0.0
      %572 = vmatpush.msra.mxu0 %v527
      %573 = vmatpush.msra.mxu0 %v526
      %574 = vmatmul.f32.gmra.mxu0 %v556
      %v575 = vpop.f32.mrf.mxu0
      %v576 = vadd.f32 0.0, %v575
      %577 = vdwg.mxu0
      %v578 = vmax.f32 %v551, %v576
      %v579 = vld [vmem:[%s5] sm:$0xff]
      %v580 = vld [vmem:[%s5 + $0x8] sm:$0xff]
      %v581 = vld [vmem:[%s5 + $0x10] sm:$0xff]
      %v582 = vld [vmem:[%s5 + $0x18] sm:$0xff]
      %v583 = vld [vmem:[%s5 + $0x20] sm:$0xff]
      %v584 = vld [vmem:[%s5 + $0x28] sm:$0xff]
      %v585 = vld [vmem:[%s5 + $0x30] sm:$0xff]
      %v586 = vld [vmem:[%s5 + $0x38] sm:$0xff]
      %v587 = vld [vmem:[%s5 + $0x40] sm:$0xff]
      %v588 = vld [vmem:[%s5 + $0x48] sm:$0xff]
      %v589 = vld [vmem:[%s5 + $0x50] sm:$0xff]
      %v590 = vld [vmem:[%s5 + $0x58] sm:$0xff]
      %v591 = vld [vmem:[%s5 + $0x60] sm:$0xff]
      %v592 = vld [vmem:[%s5 + $0x68] sm:$0xff]
      %v593 = vld [vmem:[%s5 + $0x70] sm:$0xff]
      %v594 = vld [vmem:[%s5 + $0x78] sm:$0xff]
      %595 = vmatpush.msra.mxu0 %v594
      %596 = vmatpush.msra.mxu0 %v593
      %597 = vmatpush.msra.mxu0 %v592
      %598 = vmatpush.msra.mxu0 %v591
      %599 = vmatpush.msra.mxu0 %v590
      %600 = vmatpush.msra.mxu0 %v589
      %601 = vmatpush.msra.mxu0 %v588
      %602 = vmatpush.msra.mxu0 %v587
      %603 = vmatpush.msra.mxu0 %v586
      %604 = vmatpush.msra.mxu0 %v585
      %605 = vmatpush.msra.mxu0 %v584
      %606 = vmatpush.msra.mxu0 %v583
      %607 = vmatpush.msra.mxu0 %v582
      %608 = vmatpush.msra.mxu0 %v581
      %609 = vmatpush.msra.mxu0 %v580
      %610 = vmatpush.msra.mxu0 %v579
      %611 = vmatmul.f32.gmra.mxu0 %v578
      %v612 = vpop.f32.mrf.mxu0
      %v613 = vadd.f32 0.0, %v612
      %614 = vdwg.mxu0
      %s615 = scalar_lea.vmem %s5, 128
      %v616 = vld [vmem:[%s615] sm:$0xff]
      %v617 = vld [vmem:[%s615 + $0x8] sm:$0xff]
      %v618 = vld [vmem:[%s615 + $0x10] sm:$0xff]
      %v619 = vld [vmem:[%s615 + $0x18] sm:$0xff]
      %v620 = vld [vmem:[%s615 + $0x20] sm:$0xff]
      %v621 = vld [vmem:[%s615 + $0x28] sm:$0xff]
      %v622 = vld [vmem:[%s615 + $0x30] sm:$0xff]
      %v623 = vld [vmem:[%s615 + $0x38] sm:$0xff]
      %v624 = vld [vmem:[%s615 + $0x40] sm:$0xff]
      %v625 = vld [vmem:[%s615 + $0x48] sm:$0xff]
      %v626 = vld [vmem:[%s615 + $0x50] sm:$0xff]
      %v627 = vld [vmem:[%s615 + $0x58] sm:$0xff]
      %v628 = vld [vmem:[%s615 + $0x60] sm:$0xff]
      %v629 = vld [vmem:[%s615 + $0x68] sm:$0xff]
      %v630 = vld [vmem:[%s615 + $0x70] sm:$0xff]
      %v631 = vld [vmem:[%s615 + $0x78] sm:$0xff]
      %632 = vmatpush.msra.mxu0 %v631
      %633 = vmatpush.msra.mxu0 %v630
      %634 = vmatpush.msra.mxu0 %v629
      %635 = vmatpush.msra.mxu0 %v628
      %636 = vmatpush.msra.mxu0 %v627
      %637 = vmatpush.msra.mxu0 %v626
      %638 = vmatpush.msra.mxu0 %v625
      %639 = vmatpush.msra.mxu0 %v624
      %640 = vmatpush.msra.mxu0 %v623
      %641 = vmatpush.msra.mxu0 %v622
      %642 = vmatpush.msra.mxu0 %v621
      %643 = vmatpush.msra.mxu0 %v620
      %644 = vmatpush.msra.mxu0 %v619
      %645 = vmatpush.msra.mxu0 %v618
      %646 = vmatpush.msra.mxu0 %v617
      %647 = vmatpush.msra.mxu0 %v616
      %648 = vmatmul.f32.gmra.mxu0 %v578
      %v649 = vpop.f32.mrf.mxu0
      %v650 = vadd.f32 0.0, %v649
      %651 = vdwg.mxu0
      %v652 = vmax.f32 %v613, %v650
      %653 = vst.msk [vmem:[#allocation3] sm:$0x1] %vm385, 0.0
      %654 = vst.msk [vmem:[#allocation3 + $0x9] sm:$0x1] %vm385, 0.0
      %655 = vst.msk [vmem:[#allocation3 + $0x1] sm:$0xff] %vm390, %v652
      %v656 = vld [vmem:[#allocation3] sm:$0xff]
      %v657 = vld [vmem:[%s6] sm:$0xff]
      %v658 = vld [vmem:[%s6 + $0x8] sm:$0xff]
      %v659 = vld [vmem:[%s6 + $0x10] sm:$0xff]
      %v660 = vld [vmem:[%s6 + $0x18] sm:$0xff]
      %v661 = vld [vmem:[%s6 + $0x20] sm:$0xff]
      %v662 = vld [vmem:[%s6 + $0x28] sm:$0xff]
      %v663 = vld [vmem:[%s6 + $0x30] sm:$0xff]
      %v664 = vld [vmem:[%s6 + $0x38] sm:$0xff]
      %v665 = vld [vmem:[%s6 + $0x40] sm:$0xff]
      %v666 = vld [vmem:[%s6 + $0x48] sm:$0xff]
      %v667 = vld [vmem:[%s6 + $0x50] sm:$0xff]
      %v668 = vld [vmem:[%s6 + $0x58] sm:$0xff]
      %v669 = vld [vmem:[%s6 + $0x60] sm:$0xff]
      %v670 = vld [vmem:[%s6 + $0x68] sm:$0xff]
      %v671 = vld [vmem:[%s6 + $0x70] sm:$0xff]
      %v672 = vld [vmem:[%s6 + $0x78] sm:$0xff]
      %v673 = vld [vmem:[#allocation3 + $0x1] sm:$0xff]
      %s674 = scalar_lea.vmem %s6, 128
      %v675 = vld [vmem:[%s674] sm:$0xff]
      %v676 = vld [vmem:[%s674 + $0x8] sm:$0xff]
      %v677 = vld [vmem:[%s674 + $0x10] sm:$0xff]
      %v678 = vld [vmem:[%s674 + $0x18] sm:$0xff]
      %v679 = vld [vmem:[%s674 + $0x20] sm:$0xff]
      %v680 = vld [vmem:[%s674 + $0x28] sm:$0xff]
      %v681 = vld [vmem:[%s674 + $0x30] sm:$0xff]
      %v682 = vld [vmem:[%s674 + $0x38] sm:$0xff]
      %v683 = vld [vmem:[%s674 + $0x40] sm:$0xff]
      %v684 = vld [vmem:[%s674 + $0x48] sm:$0xff]
      %v685 = vld [vmem:[%s674 + $0x50] sm:$0xff]
      %v686 = vld [vmem:[%s674 + $0x58] sm:$0xff]
      %v687 = vld [vmem:[%s674 + $0x60] sm:$0xff]
      %v688 = vld [vmem:[%s674 + $0x68] sm:$0xff]
      %v689 = vld [vmem:[%s674 + $0x70] sm:$0xff]
      %v690 = vld [vmem:[%s674 + $0x78] sm:$0xff]
      %v692 = vsel %vm390, %v673, 0
      %694 = vmatpush.msra.mxu0 0.0
      %695 = vmatpush.msra.mxu0 0.0
      %696 = vmatpush.msra.mxu0 0.0
      %697 = vmatpush.msra.mxu0 0.0
      %698 = vmatpush.msra.mxu0 0.0
      %699 = vmatpush.msra.mxu0 0.0
      %700 = vmatpush.msra.mxu0 0.0
      %701 = vmatpush.msra.mxu0 0.0
      %702 = vmatpush.msra.mxu0 %v689
      %703 = vmatpush.msra.mxu0 %v687
      %704 = vmatpush.msra.mxu0 %v685
      %705 = vmatpush.msra.mxu0 %v683
      %706 = vmatpush.msra.mxu0 %v681
      %707 = vmatpush.msra.mxu0 %v679
      %708 = vmatpush.msra.mxu0 %v677
      %709 = vmatpush.msra.mxu0 %v675
      %710 = vmatmul.f32.gmra.mxu0 %v692
      %v711 = vpop.f32.mrf.mxu0
      %v712 = vadd.f32 0.0, %v711
      %713 = vdwg.mxu0
      %714 = vmatpush.msra.mxu0 0.0
      %715 = vmatpush.msra.mxu0 0.0
      %716 = vmatpush.msra.mxu0 0.0
      %717 = vmatpush.msra.mxu0 0.0
      %718 = vmatpush.msra.mxu0 0.0
      %719 = vmatpush.msra.mxu0 0.0
      %720 = vmatpush.msra.mxu0 0.0
      %721 = vmatpush.msra.mxu0 0.0
      %722 = vmatpush.msra.mxu0 %v690
      %723 = vmatpush.msra.mxu0 %v688
      %724 = vmatpush.msra.mxu0 %v686
      %725 = vmatpush.msra.mxu0 %v684
      %726 = vmatpush.msra.mxu0 %v682
      %727 = vmatpush.msra.mxu0 %v680
      %728 = vmatpush.msra.mxu0 %v678
      %729 = vmatpush.msra.mxu0 %v676
      %730 = vmatmul.f32.gmra.mxu0 %v692
      %v731 = vpop.f32.mrf.mxu0
      %v732 = vadd.f32 0.0, %v731
      %733 = vdwg.mxu0
      %v735 = vsel %vm390, %v656, 0
      %737 = vmatpush.msra.mxu0 0.0
      %738 = vmatpush.msra.mxu0 0.0
      %739 = vmatpush.msra.mxu0 0.0
      %740 = vmatpush.msra.mxu0 0.0
      %741 = vmatpush.msra.mxu0 0.0
      %742 = vmatpush.msra.mxu0 0.0
      %743 = vmatpush.msra.mxu0 0.0
      %744 = vmatpush.msra.mxu0 0.0
      %745 = vmatpush.msra.mxu0 %v671
      %746 = vmatpush.msra.mxu0 %v669
      %747 = vmatpush.msra.mxu0 %v667
      %748 = vmatpush.msra.mxu0 %v665
      %749 = vmatpush.msra.mxu0 %v663
      %750 = vmatpush.msra.mxu0 %v661
      %751 = vmatpush.msra.mxu0 %v659
      %752 = vmatpush.msra.mxu0 %v657
      %753 = vmatmul.f32.gmra.mxu0 %v735
      %v754 = vpop.f32.mrf.mxu0
      %v755 = vadd.f32 %v712, %v754
      %756 = vdwg.mxu0
      %757 = vmatpush.msra.mxu0 0.0
      %758 = vmatpush.msra.mxu0 0.0
      %759 = vmatpush.msra.mxu0 0.0
      %760 = vmatpush.msra.mxu0 0.0
      %761 = vmatpush.msra.mxu0 0.0
      %762 = vmatpush.msra.mxu0 0.0
      %763 = vmatpush.msra.mxu0 0.0
      %764 = vmatpush.msra.mxu0 0.0
      %765 = vmatpush.msra.mxu0 %v672
      %766 = vmatpush.msra.mxu0 %v670
      %767 = vmatpush.msra.mxu0 %v668
      %768 = vmatpush.msra.mxu0 %v666
      %769 = vmatpush.msra.mxu0 %v664
      %770 = vmatpush.msra.mxu0 %v662
      %771 = vmatpush.msra.mxu0 %v660
      %772 = vmatpush.msra.mxu0 %v658
      %773 = vmatmul.f32.gmra.mxu0 %v735
      %v774 = vpop.f32.mrf.mxu0
      %v775 = vadd.f32 %v732, %v774
      %776 = vdwg.mxu0
      %v777 = vld [vmem:[#allocation3 + $0x2] sm:$0xff]
      %s778 = scalar_lea.vmem %s6, 256
      %v779 = vld [vmem:[%s778] sm:$0xff]
      %v780 = vld [vmem:[%s778 + $0x8] sm:$0xff]
      %v781 = vld [vmem:[%s778 + $0x10] sm:$0xff]
      %v782 = vld [vmem:[%s778 + $0x18] sm:$0xff]
      %v783 = vld [vmem:[%s778 + $0x20] sm:$0xff]
      %v784 = vld [vmem:[%s778 + $0x28] sm:$0xff]
      %v785 = vld [vmem:[%s778 + $0x30] sm:$0xff]
      %v786 = vld [vmem:[%s778 + $0x38] sm:$0xff]
      %v787 = vld [vmem:[%s778 + $0x40] sm:$0xff]
      %v788 = vld [vmem:[%s778 + $0x48] sm:$0xff]
      %v789 = vld [vmem:[%s778 + $0x50] sm:$0xff]
      %v790 = vld [vmem:[%s778 + $0x58] sm:$0xff]
      %v791 = vld [vmem:[%s778 + $0x60] sm:$0xff]
      %v792 = vld [vmem:[%s778 + $0x68] sm:$0xff]
      %v793 = vld [vmem:[%s778 + $0x70] sm:$0xff]
      %v794 = vld [vmem:[%s778 + $0x78] sm:$0xff]
      %v796 = vsel %vm390, %v777, 0
      %798 = vmatpush.msra.mxu0 0.0
      %799 = vmatpush.msra.mxu0 0.0
      %800 = vmatpush.msra.mxu0 0.0
      %801 = vmatpush.msra.mxu0 0.0
      %802 = vmatpush.msra.mxu0 0.0
      %803 = vmatpush.msra.mxu0 0.0
      %804 = vmatpush.msra.mxu0 0.0
      %805 = vmatpush.msra.mxu0 0.0
      %806 = vmatpush.msra.mxu0 %v793
      %807 = vmatpush.msra.mxu0 %v791
      %808 = vmatpush.msra.mxu0 %v789
      %809 = vmatpush.msra.mxu0 %v787
      %810 = vmatpush.msra.mxu0 %v785
      %811 = vmatpush.msra.mxu0 %v783
      %812 = vmatpush.msra.mxu0 %v781
      %813 = vmatpush.msra.mxu0 %v779
      %814 = vmatmul.f32.gmra.mxu0 %v796
      %v815 = vpop.f32.mrf.mxu0
      %v816 = vadd.f32 0.0, %v815
      %817 = vdwg.mxu0
      %818 = vmatpush.msra.mxu0 0.0
      %819 = vmatpush.msra.mxu0 0.0
      %820 = vmatpush.msra.mxu0 0.0
      %821 = vmatpush.msra.mxu0 0.0
      %822 = vmatpush.msra.mxu0 0.0
      %823 = vmatpush.msra.mxu0 0.0
      %824 = vmatpush.msra.mxu0 0.0
      %825 = vmatpush.msra.mxu0 0.0
      %826 = vmatpush.msra.mxu0 %v794
      %827 = vmatpush.msra.mxu0 %v792
      %828 = vmatpush.msra.mxu0 %v790
      %829 = vmatpush.msra.mxu0 %v788
      %830 = vmatpush.msra.mxu0 %v786
      %831 = vmatpush.msra.mxu0 %v784
      %832 = vmatpush.msra.mxu0 %v782
      %833 = vmatpush.msra.mxu0 %v780
      %834 = vmatmul.f32.gmra.mxu0 %v796
      %v835 = vpop.f32.mrf.mxu0
      %v836 = vadd.f32 0.0, %v835
      %837 = vdwg.mxu0
      %v838 = vadd.f32 %v755, %v816
      %v839 = vadd.f32 %v775, %v836
      %v840 = vld [vmem:[%s7] sm:$0x3]
      %v842 = vperm.slane %v840, 0
      %v843 = vperm.slane %v840, 1
      %v846 = vmul.f32 %v838, %v842
      %v847 = vmul.f32 %v839, %v843
      %v848 = vld [vmem:[%s8] sm:$0x3]
      %v850 = vperm.slane %v848, 0
      %v851 = vperm.slane %v848, 1
      %v854 = vadd.f32 %v846, %v850
      %v855 = vadd.f32 %v847, %v851
      %v856 = vmax.f32 %v854, 0.0
      %v857 = vmax.f32 %v855, 0.0
      %v858 = vld [vmem:[%s9] sm:$0xf]
      %vm859 = vcmask 64512
      %v861 = vsel %vm859, %v858, 0
      %863 = vmatpush.msra.mxu0 0.0
      %864 = vmatpush.msra.mxu0 0.0
      %865 = vmatpush.msra.mxu0 0.0
      %866 = vmatpush.msra.mxu0 0.0
      %867 = vmatpush.msra.mxu0 0.0
      %868 = vmatpush.msra.mxu0 0.0
      %869 = vmatpush.msra.mxu0 0.0
      %870 = vmatpush.msra.mxu0 0.0
      %871 = vmatpush.msra.mxu0 0.0
      %872 = vmatpush.msra.mxu0 0.0
      %873 = vmatpush.msra.mxu0 0.0
      %874 = vmatpush.msra.mxu0 0.0
      %875 = vmatpush.msra.mxu0 0.0
      %876 = vmatpush.msra.mxu0 0.0
      %877 = vmatpush.msra.mxu0 0.0
      %878 = vmatpush.msra.mxu0 %v856
      %879 = vmatmul.f32.gmra.mxu0 %v861
      %v880 = vpop.f32.mrf.mxu0
      %v881 = vadd.f32 0.0, %v880
      %882 = vdwg.mxu0
      %883 = vmatpush.msra.mxu0 0.0
      %884 = vmatpush.msra.mxu0 0.0
      %885 = vmatpush.msra.mxu0 0.0
      %886 = vmatpush.msra.mxu0 0.0
      %887 = vmatpush.msra.mxu0 0.0
      %888 = vmatpush.msra.mxu0 0.0
      %889 = vmatpush.msra.mxu0 0.0
      %890 = vmatpush.msra.mxu0 0.0
      %891 = vmatpush.msra.mxu0 0.0
      %892 = vmatpush.msra.mxu0 0.0
      %893 = vmatpush.msra.mxu0 0.0
      %894 = vmatpush.msra.mxu0 0.0
      %895 = vmatpush.msra.mxu0 0.0
      %896 = vmatpush.msra.mxu0 0.0
      %897 = vmatpush.msra.mxu0 0.0
      %898 = vmatpush.msra.mxu0 %v857
      %899 = vmatmul.f32.gmra.mxu0 %v861
      %v900 = vpop.f32.mrf.mxu0
      %v901 = vadd.f32 0.0, %v900
      %902 = vdwg.mxu0
      %s903 = scalar_lea.vmem %s9, 4
      %v904 = vld [vmem:[%s903] sm:$0xf]
      %v906 = vsel %vm859, %v904, 0
      %908 = vmatpush.msra.mxu0 0.0
      %909 = vmatpush.msra.mxu0 0.0
      %910 = vmatpush.msra.mxu0 0.0
      %911 = vmatpush.msra.mxu0 0.0
      %912 = vmatpush.msra.mxu0 0.0
      %913 = vmatpush.msra.mxu0 0.0
      %914 = vmatpush.msra.mxu0 0.0
      %915 = vmatpush.msra.mxu0 0.0
      %916 = vmatpush.msra.mxu0 0.0
      %917 = vmatpush.msra.mxu0 0.0
      %918 = vmatpush.msra.mxu0 0.0
      %919 = vmatpush.msra.mxu0 0.0
      %920 = vmatpush.msra.mxu0 0.0
      %921 = vmatpush.msra.mxu0 0.0
      %922 = vmatpush.msra.mxu0 0.0
      %923 = vmatpush.msra.mxu0 %v856
      %924 = vmatmul.f32.gmra.mxu0 %v906
      %v925 = vpop.f32.mrf.mxu0
      %v926 = vadd.f32 0.0, %v925
      %927 = vdwg.mxu0
      %928 = vmatpush.msra.mxu0 0.0
      %929 = vmatpush.msra.mxu0 0.0
      %930 = vmatpush.msra.mxu0 0.0
      %931 = vmatpush.msra.mxu0 0.0
      %932 = vmatpush.msra.mxu0 0.0
      %933 = vmatpush.msra.mxu0 0.0
      %934 = vmatpush.msra.mxu0 0.0
      %935 = vmatpush.msra.mxu0 0.0
      %936 = vmatpush.msra.mxu0 0.0
      %937 = vmatpush.msra.mxu0 0.0
      %938 = vmatpush.msra.mxu0 0.0
      %939 = vmatpush.msra.mxu0 0.0
      %940 = vmatpush.msra.mxu0 0.0
      %941 = vmatpush.msra.mxu0 0.0
      %942 = vmatpush.msra.mxu0 0.0
      %943 = vmatpush.msra.mxu0 %v857
      %944 = vmatmul.f32.gmra.mxu0 %v906
      %v945 = vpop.f32.mrf.mxu0
      %v946 = vadd.f32 0.0, %v945
      %947 = vdwg.mxu0
      %v948 = vmax.f32 %v881, %v926
      %v949 = vmax.f32 %v901, %v946
      %v950 = vld [vmem:[%s10] sm:$0xff]
      %v951 = vld [vmem:[%s10 + $0x8] sm:$0xff]
      %v952 = vld [vmem:[%s10 + $0x10] sm:$0xff]
      %v953 = vld [vmem:[%s10 + $0x18] sm:$0xff]
      %v954 = vld [vmem:[%s10 + $0x20] sm:$0xff]
      %v955 = vld [vmem:[%s10 + $0x28] sm:$0xff]
      %v956 = vld [vmem:[%s10 + $0x30] sm:$0xff]
      %v957 = vld [vmem:[%s10 + $0x38] sm:$0xff]
      %v958 = vld [vmem:[%s10 + $0x40] sm:$0xff]
      %v959 = vld [vmem:[%s10 + $0x48] sm:$0xff]
      %v960 = vld [vmem:[%s10 + $0x50] sm:$0xff]
      %v961 = vld [vmem:[%s10 + $0x58] sm:$0xff]
      %v962 = vld [vmem:[%s10 + $0x60] sm:$0xff]
      %v963 = vld [vmem:[%s10 + $0x68] sm:$0xff]
      %v964 = vld [vmem:[%s10 + $0x70] sm:$0xff]
      %v965 = vld [vmem:[%s10 + $0x78] sm:$0xff]
      %v966 = vld [vmem:[%s10 + $0x80] sm:$0xff]
      %v967 = vld [vmem:[%s10 + $0x88] sm:$0xff]
      %v968 = vld [vmem:[%s10 + $0x90] sm:$0xff]
      %v969 = vld [vmem:[%s10 + $0x98] sm:$0xff]
      %v970 = vld [vmem:[%s10 + $0xa0] sm:$0xff]
      %v971 = vld [vmem:[%s10 + $0xa8] sm:$0xff]
      %v972 = vld [vmem:[%s10 + $0xb0] sm:$0xff]
      %v973 = vld [vmem:[%s10 + $0xb8] sm:$0xff]
      %v974 = vld [vmem:[%s10 + $0xc0] sm:$0xff]
      %v975 = vld [vmem:[%s10 + $0xc8] sm:$0xff]
      %v976 = vld [vmem:[%s10 + $0xd0] sm:$0xff]
      %v977 = vld [vmem:[%s10 + $0xd8] sm:$0xff]
      %v978 = vld [vmem:[%s10 + $0xe0] sm:$0xff]
      %v979 = vld [vmem:[%s10 + $0xe8] sm:$0xff]
      %v980 = vld [vmem:[%s10 + $0xf0] sm:$0xff]
      %v981 = vld [vmem:[%s10 + $0xf8] sm:$0xff]
      %982 = vmatpush.msra.mxu0 %v965
      %983 = vmatpush.msra.mxu0 %v964
      %984 = vmatpush.msra.mxu0 %v963
      %985 = vmatpush.msra.mxu0 %v962
      %986 = vmatpush.msra.mxu0 %v961
      %987 = vmatpush.msra.mxu0 %v960
      %988 = vmatpush.msra.mxu0 %v959
      %989 = vmatpush.msra.mxu0 %v958
      %990 = vmatpush.msra.mxu0 %v957
      %991 = vmatpush.msra.mxu0 %v956
      %992 = vmatpush.msra.mxu0 %v955
      %993 = vmatpush.msra.mxu0 %v954
      %994 = vmatpush.msra.mxu0 %v953
      %995 = vmatpush.msra.mxu0 %v952
      %996 = vmatpush.msra.mxu0 %v951
      %997 = vmatpush.msra.mxu0 %v950
      %998 = vmatmul.f32.gmra.mxu0 %v948
      %v999 = vpop.f32.mrf.mxu0
      %v1000 = vadd.f32 0.0, %v999
      %1001 = vdwg.mxu0
      %1002 = vmatpush.msra.mxu0 %v981
      %1003 = vmatpush.msra.mxu0 %v980
      %1004 = vmatpush.msra.mxu0 %v979
      %1005 = vmatpush.msra.mxu0 %v978
      %1006 = vmatpush.msra.mxu0 %v977
      %1007 = vmatpush.msra.mxu0 %v976
      %1008 = vmatpush.msra.mxu0 %v975
      %1009 = vmatpush.msra.mxu0 %v974
      %1010 = vmatpush.msra.mxu0 %v973
      %1011 = vmatpush.msra.mxu0 %v972
      %1012 = vmatpush.msra.mxu0 %v971
      %1013 = vmatpush.msra.mxu0 %v970
      %1014 = vmatpush.msra.mxu0 %v969
      %1015 = vmatpush.msra.mxu0 %v968
      %1016 = vmatpush.msra.mxu0 %v967
      %1017 = vmatpush.msra.mxu0 %v966
      %1018 = vmatmul.f32.gmra.mxu0 %v949
      %v1019 = vpop.f32.mrf.mxu0
      %v1020 = vadd.f32 %v1000, %v1019
      %1021 = vdwg.mxu0
      %s1022 = scalar_lea.vmem %s10, 256
      %v1023 = vld [vmem:[%s1022] sm:$0xff]
      %v1024 = vld [vmem:[%s1022 + $0x8] sm:$0xff]
      %v1025 = vld [vmem:[%s1022 + $0x10] sm:$0xff]
      %v1026 = vld [vmem:[%s1022 + $0x18] sm:$0xff]
      %v1027 = vld [vmem:[%s1022 + $0x20] sm:$0xff]
      %v1028 = vld [vmem:[%s1022 + $0x28] sm:$0xff]
      %v1029 = vld [vmem:[%s1022 + $0x30] sm:$0xff]
      %v1030 = vld [vmem:[%s1022 + $0x38] sm:$0xff]
      %v1031 = vld [vmem:[%s1022 + $0x40] sm:$0xff]
      %v1032 = vld [vmem:[%s1022 + $0x48] sm:$0xff]
      %v1033 = vld [vmem:[%s1022 + $0x50] sm:$0xff]
      %v1034 = vld [vmem:[%s1022 + $0x58] sm:$0xff]
      %v1035 = vld [vmem:[%s1022 + $0x60] sm:$0xff]
      %v1036 = vld [vmem:[%s1022 + $0x68] sm:$0xff]
      %v1037 = vld [vmem:[%s1022 + $0x70] sm:$0xff]
      %v1038 = vld [vmem:[%s1022 + $0x78] sm:$0xff]
      %v1039 = vld [vmem:[%s1022 + $0x80] sm:$0xff]
      %v1040 = vld [vmem:[%s1022 + $0x88] sm:$0xff]
      %v1041 = vld [vmem:[%s1022 + $0x90] sm:$0xff]
      %v1042 = vld [vmem:[%s1022 + $0x98] sm:$0xff]
      %v1043 = vld [vmem:[%s1022 + $0xa0] sm:$0xff]
      %v1044 = vld [vmem:[%s1022 + $0xa8] sm:$0xff]
      %v1045 = vld [vmem:[%s1022 + $0xb0] sm:$0xff]
      %v1046 = vld [vmem:[%s1022 + $0xb8] sm:$0xff]
      %v1047 = vld [vmem:[%s1022 + $0xc0] sm:$0xff]
      %v1048 = vld [vmem:[%s1022 + $0xc8] sm:$0xff]
      %v1049 = vld [vmem:[%s1022 + $0xd0] sm:$0xff]
      %v1050 = vld [vmem:[%s1022 + $0xd8] sm:$0xff]
      %v1051 = vld [vmem:[%s1022 + $0xe0] sm:$0xff]
      %v1052 = vld [vmem:[%s1022 + $0xe8] sm:$0xff]
      %v1053 = vld [vmem:[%s1022 + $0xf0] sm:$0xff]
      %v1054 = vld [vmem:[%s1022 + $0xf8] sm:$0xff]
      %1055 = vmatpush.msra.mxu0 %v1038
      %1056 = vmatpush.msra.mxu0 %v1037
      %1057 = vmatpush.msra.mxu0 %v1036
      %1058 = vmatpush.msra.mxu0 %v1035
      %1059 = vmatpush.msra.mxu0 %v1034
      %1060 = vmatpush.msra.mxu0 %v1033
      %1061 = vmatpush.msra.mxu0 %v1032
      %1062 = vmatpush.msra.mxu0 %v1031
      %1063 = vmatpush.msra.mxu0 %v1030
      %1064 = vmatpush.msra.mxu0 %v1029
      %1065 = vmatpush.msra.mxu0 %v1028
      %1066 = vmatpush.msra.mxu0 %v1027
      %1067 = vmatpush.msra.mxu0 %v1026
      %1068 = vmatpush.msra.mxu0 %v1025
      %1069 = vmatpush.msra.mxu0 %v1024
      %1070 = vmatpush.msra.mxu0 %v1023
      %1071 = vmatmul.f32.gmra.mxu0 %v948
      %v1072 = vpop.f32.mrf.mxu0
      %v1073 = vadd.f32 0.0, %v1072
      %1074 = vdwg.mxu0
      %1075 = vmatpush.msra.mxu0 %v1054
      %1076 = vmatpush.msra.mxu0 %v1053
      %1077 = vmatpush.msra.mxu0 %v1052
      %1078 = vmatpush.msra.mxu0 %v1051
      %1079 = vmatpush.msra.mxu0 %v1050
      %1080 = vmatpush.msra.mxu0 %v1049
      %1081 = vmatpush.msra.mxu0 %v1048
      %1082 = vmatpush.msra.mxu0 %v1047
      %1083 = vmatpush.msra.mxu0 %v1046
      %1084 = vmatpush.msra.mxu0 %v1045
      %1085 = vmatpush.msra.mxu0 %v1044
      %1086 = vmatpush.msra.mxu0 %v1043
      %1087 = vmatpush.msra.mxu0 %v1042
      %1088 = vmatpush.msra.mxu0 %v1041
      %1089 = vmatpush.msra.mxu0 %v1040
      %1090 = vmatpush.msra.mxu0 %v1039
      %1091 = vmatmul.f32.gmra.mxu0 %v949
      %v1092 = vpop.f32.mrf.mxu0
      %v1093 = vadd.f32 %v1073, %v1092
      %1094 = vdwg.mxu0
      %v1095 = vmax.f32 %v1020, %v1093
      %1096 = vst [vmem:[%s384] sm:$0xf] %v1095
      %p1097 = scmp.lt.s32.totalorder %s22, 1
      %s1098 = scalar_select %p1097, %s22, 1
      %s1099 = smul.addr %s1098, 4
      %s1100 = scalar_lea.vmem %s11, %s1099
      // Predicated region
      $region65: #{cnn_layers_forward.1} parent=63 // pred_check
        %p1101 = pneg %p276
      $region66: #{cnn_layers_forward.1} parent=63 // pred_check_branch
        %1103 = sbr.rel (%p1101) target = $region68
      $region67: #{cnn_layers_forward.1} parent=63 // pred_region
        _
      $region68: #{cnn_layers_forward.1} parent=63 // pred_fallthru
        _
    $region64: #{cnn_layers_forward.1} parent=5 // pred_fallthru
      _
    %p1104 = scmp.le.s32.totalorder 2, %s17
    // Predicated region
    $region69: #{cnn_layers_forward.1} parent=5 // pred_check
      %p1105 = pneg %p1104
    $region70: #{cnn_layers_forward.1} parent=5 // pred_check_branch
      %1107 = sbr.rel (%p1105) target = $region72
    $region71: #{cnn_layers_forward.1} parent=5 // pred_region
      %s1108 = ssub.s32 %s17, 2
      // Predicated region
      $region73: #{cnn_layers_forward.1} parent=71 // pred_check
        %p1109 = pneg %p282
      $region74: #{cnn_layers_forward.1} parent=71 // pred_check_branch
        %1111 = sbr.rel (%p1109) target = $region76
      $region75: #{cnn_layers_forward.1} parent=71 // pred_region
        %p1112 = scmp.lt.s32.totalorder %s23, 1
        %s1113 = scalar_select %p1112, %s23, 1
        %s1114 = smul.addr %s1113, 4
        %s1115 = scalar_lea.vmem %s11, %s1114
      $region76: #{cnn_layers_forward.1} parent=71 // pred_fallthru
        _
    $region72: #{cnn_layers_forward.1} parent=5 // pred_fallthru
      _
  $region6: #{cnn_layers_forward.1} parent=0 // loop_footer
    %s21 = sadd.s32 1, %s17
  $region7: #{cnn_layers_forward.1} parent=0 // loop_footer_branch
    %16 = sbr.rel target = $region3
  $region8: #{cnn_layers_forward.1} parent=0 // loop_exit
    _

</llo_original>
